<compile_context>
chip_gen: v7x
topology: tpu7x:2x2x1
jax: 0.10.0
libtpu: 0.0.40
codegen_flags: <defaults>
</compile_context>

<pallas_src>
import math

import jax
import jax.numpy as jnp
from jax import lax
from jax.experimental import pallas as pl
from jax.experimental import pallas  # noqa: F401  (kept for clarity)
from jax.experimental.pallas import tpu as pltpu  # noqa: F401

# ---- model hyper-parameters (small, consistent with TransEn.__init__) ----
D_MODEL = 32          # c_mid
NHEAD = 8
HEAD_DIM = D_MODEL // NHEAD
DIM_FF = 64           # dim_feedforward (kept small for the demo)
NUM_LAYERS = 2
SEQ_LEN = 16          # position_encode
BATCH = 2
LN_EPS = 1e-5

N_TOK = BATCH * SEQ_LEN          # 32 token rows  (== D_MODEL here)
N_COL = NHEAD * N_TOK            # 256 block-diagonal score columns

# ---- column offsets inside the packed (32, 672) parameter/constant slab ----
_C_BMASK = 0                              # (N_TOK, N_COL)   cross-batch mask
_C_WQKV = _C_BMASK + N_COL                # (D, 3D)          QKV projection (Q pre-scaled)
_C_WO = _C_WQKV + 3 * D_MODEL             # (D, D)           attention out projection
_C_W1 = _C_WO + D_MODEL                   # (D, F)           FFN up
_C_W2 = _C_W1 + DIM_FF                    # (D, F)           FFN down (PyTorch layout, used via A@B.T)
_C_BIAS = _C_W2 + DIM_FF                  # (32, 96) bias block (rows 0..3 used)
_C_POS = _C_BIAS + 3 * D_MODEL            # (D, N_TOK)       positional enc tiled over batch
_C_EYE = _C_POS + N_TOK                   # (32, 32)         identity (N_TOK == D == 32)
_C_TOT = _C_EYE + N_TOK                   # 672

# dot_general dimension numbers for  A @ B.T  (contract last dim of both operands)
_DN_BT = (((1,), (1,)), ((), ()))


def _layernorm(x, gamma, beta):
    mu = jnp.mean(x, axis=-1, keepdims=True)
    var = jnp.mean((x - mu) ** 2, axis=-1, keepdims=True)
    return (x - mu) * lax.rsqrt(var + LN_EPS) * gamma + beta


# ----------------------------- Pallas kernel ------------------------------
def trans_en_kernel(feat_ref, slab_ref, hm_ref, o_ref):
    """Whole TransEn forward for the full batch in one grid-less invocation."""
    f32 = jnp.float32
    B, D, L = feat_ref.shape          # (2, 32, 16)
    N = B * L                         # 32 token rows
    H = NHEAD

    # ---- static slices of the single packed param/constant slab ----
    bmask = slab_ref[:, _C_BMASK:_C_WQKV]     # (N, H*N)  1 = same-batch column
    wqkv = slab_ref[:, _C_WQKV:_C_WO]         # (D, 3D)   1/sqrt(Hd) folded into Q cols
    wo = slab_ref[:, _C_WO:_C_W1]             # (D, D)
    w1 = slab_ref[:, _C_W1:_C_W2]             # (D, F)
    w2 = slab_ref[:, _C_W2:_C_BIAS]           # (D, F)    used as h1 @ w2.T
    pos = slab_ref[:, _C_POS:_C_EYE]          # (D, N)    pos enc, batch-tiled
    eye = slab_ref[:, _C_EYE:_C_TOT]          # (32, 32)  identity for both transposes
    bqkv = slab_ref[0:1, _C_BIAS:_C_BIAS + 3 * D]
    bf1 = slab_ref[1:2, _C_BIAS:_C_BIAS + DIM_FF]
    bo = slab_ref[2:3, _C_BIAS:_C_BIAS + D]
    g1 = slab_ref[2:3, _C_BIAS + D:_C_BIAS + 2 * D]
    be1 = slab_ref[2:3, _C_BIAS + 2 * D:_C_BIAS + 3 * D]
    g2 = slab_ref[3:4, _C_BIAS:_C_BIAS + D]
    be2 = slab_ref[3:4, _C_BIAS + D:_C_BIAS + 2 * D]
    bf2 = slab_ref[3:4, _C_BIAS + 2 * D:_C_BIAS + 3 * D]
    hm = hm_ref[...]                          # (H*N, D) block-diagonal head mask

    # ---- fused pos-add + NCL -> token-rows: ONE transpose matmul for the batch ----
    xdl = jnp.concatenate([feat_ref[b] for b in range(B)], axis=1) + pos    # (D, N)
    x = lax.dot_general(eye, xdl, _DN_BT, preferred_element_type=f32)       # (N, D)

    # TransEn deep-copies the encoder layer -> both layers share identical weights.
    for _ in range(NUM_LAYERS):
        # ---- x2 = norm1(x); x2 = self_attn(x2,x2,x2); x = x + dropout1(x2) ----
        xn = _layernorm(x, g1, be1)
        qkv = jnp.dot(xn, wqkv, preferred_element_type=f32) + bqkv           # (N, 3D)
        q = qkv[:, :D]                 # attention scale pre-folded into wqkv / bqkv
        k = qkv[:, D:2 * D]
        v = qkv[:, 2 * D:]

        # batch-stacked block-diagonal K' / V' : row ordering is (head, batch, pos)
        kbig = jnp.tile(k, (H, 1)) * hm                                      # (H*N, D)
        vbig = jnp.tile(v, (H, 1)) * hm                                      # (H*N, D)
        s = lax.dot_general(q, kbig, _DN_BT, preferred_element_type=f32)     # (N, H*N)
        # cross-batch columns MUST be killed before exp (zeroed K' rows alone
        # would contribute exp(0)=1 and silently mix batches)
        s = jnp.where(bmask > 0.5, s, -1e30)
        # per-row shift (constant within every head segment -> per-head softmax
        # stays exact; per-head masked max only needed for extreme score spreads)
        p = jnp.exp(s - jnp.max(s, axis=-1, keepdims=True))
        p = p * bmask                                    # exact zeros cross-batch
        num = jnp.dot(p, vbig, preferred_element_type=f32)   # (N, D) heads concatenated
        den = jnp.dot(p, hm, preferred_element_type=f32)     # (N, D) per-head softmax sums
        attn = num / den                                 # exact normalize (no approx recip)
        x = x + jnp.dot(attn, wo, preferred_element_type=f32) + bo   # dropout1 == identity

        # ---- x2 = norm2(x); x2 = linear2(relu(linear1(x2))); x = x + dropout2(x2) ----
        xn2 = _layernorm(x, g2, be2)
        h1 = jnp.maximum(jnp.dot(xn2, w1, preferred_element_type=f32) + bf1, 0.0)
        x = x + lax.dot_general(h1, w2, _DN_BT, preferred_element_type=f32) + bf2

    # ---- token-rows -> NCL output: one transpose matmul, two sliced stores ----
    y = lax.dot_general(eye, x, _DN_BT, preferred_element_type=f32)          # (D, N)
    for b in range(B):
        o_ref[b] = y[:, b * L:(b + 1) * L].astype(o_ref.dtype)


def trans_en_forward(feat, slab, hm):
    """feat: (B, c_mid, position_encode) -> (B, c_mid, position_encode).

    Grid-less pallas_call: 3 input DMAs (feat, packed param/const slab, head
    mask) + 1 output DMA; every operand mapped whole into VMEM.
    """
    B, D, L = feat.shape
    cost = pl.CostEstimate(flops=4_400_000, transcendentals=16_500,
                           bytes_accessed=127_000)
    return pl.pallas_call(
        trans_en_kernel,
        out_shape=jax.ShapeDtypeStruct((B, D, L), feat.dtype),
        cost_estimate=cost,
    )(feat, slab, hm)


# ----------------------------- parameters ---------------------------------
def positional_encoding(max_len, d_model):
    position = jnp.arange(max_len, dtype=jnp.float32)[:, None]
    div_term = jnp.exp(jnp.arange(0, d_model, 2, dtype=jnp.float32)
                       * (-math.log(10000.0) / d_model))
    pe = jnp.zeros((max_len, d_model), jnp.float32)
    pe = pe.at[:, 0::2].set(jnp.sin(position * div_term))
    pe = pe.at[:, 1::2].set(jnp.cos(position * div_term))
    return pe.T[None]                                   # (1, d_model, max_len)


def init_params(key):
    """Deterministic synthetic parameters (weights pre-transposed: y = x @ W_t + b)."""
    D, F = D_MODEL, DIM_FF
    ks = jax.random.split(key, 8)

    def w(k, shape, fan_in):
        return jax.random.normal(k, shape, jnp.float32) * (1.0 / math.sqrt(fan_in))

    def b(k, shape):
        return jax.random.normal(k, shape, jnp.float32) * 0.02

    return dict(
        wqkv_t=w(ks[0], (D, 3 * D), D), bqkv=b(ks[1], (1, 3 * D)),
        wo_t=w(ks[2], (D, D), D),       bo=b(ks[3], (1, D)),
        g1=jnp.ones((1, D), jnp.float32), be1=jnp.zeros((1, D), jnp.float32),
        g2=jnp.ones((1, D), jnp.float32), be2=jnp.zeros((1, D), jnp.float32),
        w1_t=w(ks[4], (D, F), D),       bf1=b(ks[5], (1, F)),
        w2_t=w(ks[6], (F, D), F),       bf2=b(ks[7], (1, D)),
    )


def prepare_params(p):
    """Fold the 1/sqrt(head_dim) attention scale into the Q projection (one-time)."""
    scale = 1.0 / math.sqrt(HEAD_DIM)
    q_scale = jnp.concatenate(
        [jnp.full((D_MODEL,), scale, jnp.float32),
         jnp.ones((2 * D_MODEL,), jnp.float32)], axis=0)[None, :]         # (1, 3D)
    out = dict(p)
    out["wqkv_t"] = p["wqkv_t"] * q_scale
    out["bqkv"] = p["bqkv"] * q_scale
    return out


def pack_operands(kparams, pos):
    """Host-side one-time packing of every weight/bias/constant into 2 operands."""
    D, F, H, Hd, L, B = D_MODEL, DIM_FF, NHEAD, HEAD_DIM, SEQ_LEN, BATCH
    N = B * L
    assert N == D, "one 32x32 identity is reused for both NCL<->rows transposes"

    # bias block (32, 96): rows 0..3 hold the 8 bias/affine vectors, rest padding
    bias_blk = jnp.zeros((N, 3 * D), jnp.float32)
    bias_blk = bias_blk.at[0, :3 * D].set(kparams["bqkv"][0])
    bias_blk = bias_blk.at[1, :F].set(kparams["bf1"][0])
    bias_blk = bias_blk.at[2, :D].set(kparams["bo"][0])
    bias_blk = bias_blk.at[2, D:2 * D].set(kparams["g1"][0])
    bias_blk = bias_blk.at[2, 2 * D:3 * D].set(kparams["be1"][0])
    bias_blk = bias_blk.at[3, :D].set(kparams["g2"][0])
    bias_blk = bias_blk.at[3, D:2 * D].set(kparams["be2"][0])
    bias_blk = bias_blk.at[3, 2 * D:3 * D].set(kparams["bf2"][0])

    # precomputed constants (no iota / integer divides on the kernel critical path)
    row_b = jnp.arange(N) // L                       # batch of each token row
    col_b = (jnp.arange(H * N) // L) % B             # batch of each score column (h,b,l order)
    bmask = (col_b[None, :] == row_b[:, None]).astype(jnp.float32)          # (N, H*N)
    hm = ((jnp.arange(H * N)[:, None] // N) ==
          (jnp.arange(D)[None, :] // Hd)).astype(jnp.float32)               # (H*N, D)
    eye = jnp.eye(N, dtype=jnp.float32)                                     # (32, 32)
    pos_bl = jnp.tile(pos[0], (1, B))                                       # (D, N)

    slab = jnp.concatenate(
        [bmask, kparams["wqkv_t"], kparams["wo_t"], kparams["w1_t"],
         kparams["w2_t"].T, bias_blk, pos_bl, eye], axis=1)                 # (32, 672)
    assert slab.shape == (N, _C_TOT)
    return slab, hm


# --------------------------- pure-JAX reference ----------------------------
def _ref_layer(x, p):
    def ln(z, g, be):
        mu = z.mean(-1, keepdims=True)
        var = ((z - mu) ** 2).mean(-1, keepdims=True)
        return (z - mu) / jnp.sqrt(var + LN_EPS) * g + be

    B, L, D = x.shape
    H, Hd = NHEAD, HEAD_DIM
    xn = ln(x, p["g1"], p["be1"])
    qkv = xn @ p["wqkv_t"] + p["bqkv"]
    q, k, v = jnp.split(qkv, 3, axis=-1)
    q = q.reshape(B, L, H, Hd).transpose(0, 2, 1, 3) / math.sqrt(Hd)
    k = k.reshape(B, L, H, Hd).transpose(0, 2, 1, 3)
    v = v.reshape(B, L, H, Hd).transpose(0, 2, 1, 3)
    s = q @ k.transpose(0, 1, 3, 2)
    a = jax.nn.softmax(s, axis=-1)
    o = (a @ v).transpose(0, 2, 1, 3).reshape(B, L, D)
    x = x + (o @ p["wo_t"] + p["bo"])
    xn2 = ln(x, p["g2"], p["be2"])
    ff = jnp.maximum(xn2 @ p["w1_t"] + p["bf1"], 0.0) @ p["w2_t"] + p["bf2"]
    return x + ff


def _ref_forward(feat, params, pos):
    x = jnp.transpose(feat + pos, (0, 2, 1))
    for _ in range(NUM_LAYERS):
        x = _ref_layer(x, params)
    return jnp.transpose(x, (0, 2, 1))


# ---------------------------------- main -----------------------------------
if __name__ == "__main__":
    key = jax.random.PRNGKey(0)
    k_param, k_feat = jax.random.split(key)

    params = init_params(k_param)                       # canonical parameters
    kparams = prepare_params(params)                    # 1/sqrt(Hd) folded into QKV
    pos = positional_encoding(SEQ_LEN, D_MODEL)         # (1, D, L)
    feat = jax.random.normal(k_feat, (BATCH, D_MODEL, SEQ_LEN), jnp.float32)

    slab, hm = pack_operands(kparams, pos)              # host-side one-time packing
    slab = jax.block_until_ready(slab)
    hm = jax.block_until_ready(hm)

    out = jax.jit(trans_en_forward)(feat, slab, hm)
    out = jax.block_until_ready(out)

    ref = _ref_forward(feat, params, pos)
    max_err = float(jnp.max(jnp.abs(out - ref)))
    # Exact divide restored (no approx reciprocal); the residual 1e-3 budget
    # covers MXU accumulation-order differences between the fused block-diagonal
    # attention and the per-head XLA reference.
    if out.shape != (BATCH, D_MODEL, SEQ_LEN) or max_err > 1e-3:
        raise AssertionError(f"mismatch: shape={out.shape} max_err={max_err}")

    # TODO(synk): dropout layers are treated as identity (eval-mode semantics).
    print("KERNEL_OK")
</pallas_src>

<mosaic_0001>
module attributes {stable_mosaic.version = 11 : i64} {
  func.func @trans_en_kernel(%arg0: memref<2x32x16xf32, #tpu.memory_space<vmem>>, %arg1: memref<32x672xf32, #tpu.memory_space<vmem>>, %arg2: memref<256x32xf32, #tpu.memory_space<vmem>>, %arg3: memref<2x32x16xf32, #tpu.memory_space<vmem>>) attributes {dimension_semantics = [], scalar_prefetch = 0 : i64, scratch_operands = 0 : i64, tpu.core_type = #tpu.core_type<tc>} {
    %c0 = arith.constant 0 : index
    %c0_0 = arith.constant 0 : index
    %0 = vector.load %arg1[%c0, %c0_0] : memref<32x672xf32, #tpu.memory_space<vmem>>, vector<32x256xf32>
    %c0_1 = arith.constant 0 : index
    %c256 = arith.constant 256 : index
    %1 = vector.load %arg1[%c0_1, %c256] : memref<32x672xf32, #tpu.memory_space<vmem>>, vector<32x96xf32>
    %c0_2 = arith.constant 0 : index
    %c352 = arith.constant 352 : index
    %2 = vector.load %arg1[%c0_2, %c352] : memref<32x672xf32, #tpu.memory_space<vmem>>, vector<32x32xf32>
    %c0_3 = arith.constant 0 : index
    %c384 = arith.constant 384 : index
    %3 = vector.load %arg1[%c0_3, %c384] : memref<32x672xf32, #tpu.memory_space<vmem>>, vector<32x64xf32>
    %c0_4 = arith.constant 0 : index
    %c448 = arith.constant 448 : index
    %4 = vector.load %arg1[%c0_4, %c448] : memref<32x672xf32, #tpu.memory_space<vmem>>, vector<32x64xf32>
    %c0_5 = arith.constant 0 : index
    %c608 = arith.constant 608 : index
    %5 = vector.load %arg1[%c0_5, %c608] : memref<32x672xf32, #tpu.memory_space<vmem>>, vector<32x32xf32>
    %c0_6 = arith.constant 0 : index
    %c640 = arith.constant 640 : index
    %6 = vector.load %arg1[%c0_6, %c640] : memref<32x672xf32, #tpu.memory_space<vmem>>, vector<32x32xf32>
    %c0_7 = arith.constant 0 : index
    %c512 = arith.constant 512 : index
    %7 = vector.load %arg1[%c0_7, %c512] : memref<32x672xf32, #tpu.memory_space<vmem>>, vector<1x96xf32>
    %c1 = arith.constant 1 : index
    %c512_8 = arith.constant 512 : index
    %8 = vector.load %arg1[%c1, %c512_8] : memref<32x672xf32, #tpu.memory_space<vmem>>, vector<1x64xf32>
    %c2 = arith.constant 2 : index
    %c512_9 = arith.constant 512 : index
    %9 = vector.load %arg1[%c2, %c512_9] : memref<32x672xf32, #tpu.memory_space<vmem>>, vector<1x32xf32>
    %c2_10 = arith.constant 2 : index
    %c544 = arith.constant 544 : index
    %10 = vector.load %arg1[%c2_10, %c544] : memref<32x672xf32, #tpu.memory_space<vmem>>, vector<1x32xf32>
    %c2_11 = arith.constant 2 : index
    %c576 = arith.constant 576 : index
    %11 = vector.load %arg1[%c2_11, %c576] : memref<32x672xf32, #tpu.memory_space<vmem>>, vector<1x32xf32>
    %c3 = arith.constant 3 : index
    %c512_12 = arith.constant 512 : index
    %12 = vector.load %arg1[%c3, %c512_12] : memref<32x672xf32, #tpu.memory_space<vmem>>, vector<1x32xf32>
    %c3_13 = arith.constant 3 : index
    %c544_14 = arith.constant 544 : index
    %13 = vector.load %arg1[%c3_13, %c544_14] : memref<32x672xf32, #tpu.memory_space<vmem>>, vector<1x32xf32>
    %c3_15 = arith.constant 3 : index
    %c576_16 = arith.constant 576 : index
    %14 = vector.load %arg1[%c3_15, %c576_16] : memref<32x672xf32, #tpu.memory_space<vmem>>, vector<1x32xf32>
    %c0_17 = arith.constant 0 : index
    %c0_18 = arith.constant 0 : index
    %15 = vector.load %arg2[%c0_17, %c0_18] : memref<256x32xf32, #tpu.memory_space<vmem>>, vector<256x32xf32>
    %c0_19 = arith.constant 0 : index
    %c0_20 = arith.constant 0 : index
    %c0_21 = arith.constant 0 : index
    %16 = vector.load %arg0[%c0_19, %c0_20, %c0_21] : memref<2x32x16xf32, #tpu.memory_space<vmem>>, vector<1x32x16xf32>
    %17 = vector.shape_cast %16 : vector<1x32x16xf32> to vector<32x16xf32>
    %c1_22 = arith.constant 1 : index
    %c0_23 = arith.constant 0 : index
    %c0_24 = arith.constant 0 : index
    %18 = vector.load %arg0[%c1_22, %c0_23, %c0_24] : memref<2x32x16xf32, #tpu.memory_space<vmem>>, vector<1x32x16xf32>
    %19 = vector.shape_cast %18 : vector<1x32x16xf32> to vector<32x16xf32>
    %20 = tpu.concatenate %17, %19 in 1 : vector<32x16xf32>, vector<32x16xf32> -> vector<32x32xf32>
    %21 = arith.addf %20, %5 : vector<32x32xf32>
    %cst = arith.constant dense<0.000000e+00> : vector<32x32xf32>
    %22 = tpu.matmul %6, %21, %cst {dimension_numbers = #tpu.dot_dimension_numbers<[1], [1], [0], [0], [0, 0, 1, 0], [], []>} : vector<32x32xf32>, vector<32x32xf32>, vector<32x32xf32> -> vector<32x32xf32>
    %cst_25 = arith.constant dense<0.000000e+00> : vector<32xf32>
    %23 = vector.multi_reduction <add>, %22, %cst_25 [1] : vector<32x32xf32> to vector<32xf32>
    %24 = vector.shape_cast %23 : vector<32xf32> to vector<32x1xf32>
    %cst_26 = arith.constant 3.200000e+01 : f32
    %25 = vector.broadcast %cst_26 : f32 to vector<32x1xf32>
    %26 = arith.divf %24, %25 : vector<32x1xf32>
    %27 = vector.broadcast %26 : vector<32x1xf32> to vector<32x32xf32>
    %28 = arith.subf %22, %27 : vector<32x32xf32>
    %29 = arith.mulf %28, %28 : vector<32x32xf32>
    %cst_27 = arith.constant dense<0.000000e+00> : vector<32xf32>
    %30 = vector.multi_reduction <add>, %29, %cst_27 [1] : vector<32x32xf32> to vector<32xf32>
    %31 = vector.shape_cast %30 : vector<32xf32> to vector<32x1xf32>
    %cst_28 = arith.constant 3.200000e+01 : f32
    %32 = vector.broadcast %cst_28 : f32 to vector<32x1xf32>
    %33 = arith.divf %31, %32 : vector<32x1xf32>
    %34 = vector.broadcast %26 : vector<32x1xf32> to vector<32x32xf32>
    %35 = arith.subf %22, %34 : vector<32x32xf32>
    %cst_29 = arith.constant 9.99999974E-6 : f32
    %36 = vector.broadcast %cst_29 : f32 to vector<32x1xf32>
    %37 = arith.addf %33, %36 : vector<32x1xf32>
    %38 = math.rsqrt %37 : vector<32x1xf32>
    %39 = vector.broadcast %38 : vector<32x1xf32> to vector<32x32xf32>
    %40 = arith.mulf %35, %39 : vector<32x32xf32>
    %41 = vector.broadcast %10 : vector<1x32xf32> to vector<32x32xf32>
    %42 = arith.mulf %40, %41 : vector<32x32xf32>
    %43 = vector.broadcast %11 : vector<1x32xf32> to vector<32x32xf32>
    %44 = arith.addf %42, %43 : vector<32x32xf32>
    %cst_30 = arith.constant dense<0.000000e+00> : vector<32x96xf32>
    %45 = tpu.matmul %44, %1, %cst_30 {dimension_numbers = #tpu.dot_dimension_numbers<[1], [0], [0], [1], [0, 0, 1, 1], [], []>} : vector<32x32xf32>, vector<32x96xf32>, vector<32x96xf32> -> vector<32x96xf32>
    %46 = vector.broadcast %7 : vector<1x96xf32> to vector<32x96xf32>
    %47 = arith.addf %45, %46 : vector<32x96xf32>
    %48 = vector.extract_strided_slice %47 {offsets = [0, 0], sizes = [32, 32], strides = [1, 1]} : vector<32x96xf32> to vector<32x32xf32>
    %49 = vector.extract_strided_slice %47 {offsets = [0, 32], sizes = [32, 32], strides = [1, 1]} : vector<32x96xf32> to vector<32x32xf32>
    %50 = vector.extract_strided_slice %47 {offsets = [0, 64], sizes = [32, 32], strides = [1, 1]} : vector<32x96xf32> to vector<32x32xf32>
    %51 = tpu.concatenate %49, %49, %49, %49, %49, %49, %49, %49 in 0 : vector<32x32xf32>, vector<32x32xf32>, vector<32x32xf32>, vector<32x32xf32>, vector<32x32xf32>, vector<32x32xf32>, vector<32x32xf32>, vector<32x32xf32> -> vector<256x32xf32>
    %52 = arith.mulf %51, %15 : vector<256x32xf32>
    %53 = tpu.concatenate %50, %50, %50, %50, %50, %50, %50, %50 in 0 : vector<32x32xf32>, vector<32x32xf32>, vector<32x32xf32>, vector<32x32xf32>, vector<32x32xf32>, vector<32x32xf32>, vector<32x32xf32>, vector<32x32xf32> -> vector<256x32xf32>
    %54 = arith.mulf %53, %15 : vector<256x32xf32>
    %cst_31 = arith.constant dense<0.000000e+00> : vector<32x256xf32>
    %55 = tpu.matmul %48, %52, %cst_31 {dimension_numbers = #tpu.dot_dimension_numbers<[1], [1], [0], [0], [0, 0, 1, 0], [], []>} : vector<32x32xf32>, vector<256x32xf32>, vector<32x256xf32> -> vector<32x256xf32>
    %cst_32 = arith.constant 5.000000e-01 : f32
    %56 = vector.broadcast %cst_32 : f32 to vector<32x256xf32>
    %57 = arith.cmpf ogt, %0, %56 : vector<32x256xf32>
    %cst_33 = arith.constant -1.000000e+30 : f32
    %58 = vector.broadcast %cst_33 : f32 to vector<32x256xf32>
    %59 = arith.select %57, %55, %58 : vector<32x256xi1>, vector<32x256xf32>
    %cst_34 = arith.constant dense<0xFF800000> : vector<32xf32>
    %60 = vector.multi_reduction <maximumf>, %59, %cst_34 [1] : vector<32x256xf32> to vector<32xf32>
    %61 = vector.shape_cast %60 : vector<32xf32> to vector<32x1xf32>
    %62 = vector.broadcast %61 : vector<32x1xf32> to vector<32x256xf32>
    %63 = arith.subf %59, %62 : vector<32x256xf32>
    %64 = math.exp %63 : vector<32x256xf32>
    %65 = arith.mulf %64, %0 : vector<32x256xf32>
    %cst_35 = arith.constant dense<0.000000e+00> : vector<32x32xf32>
    %66 = tpu.matmul %65, %54, %cst_35 {dimension_numbers = #tpu.dot_dimension_numbers<[1], [0], [0], [1], [0, 0, 1, 1], [], []>} : vector<32x256xf32>, vector<256x32xf32>, vector<32x32xf32> -> vector<32x32xf32>
    %cst_36 = arith.constant dense<0.000000e+00> : vector<32x32xf32>
    %67 = tpu.matmul %65, %15, %cst_36 {dimension_numbers = #tpu.dot_dimension_numbers<[1], [0], [0], [1], [0, 0, 1, 1], [], []>} : vector<32x256xf32>, vector<256x32xf32>, vector<32x32xf32> -> vector<32x32xf32>
    %68 = arith.divf %66, %67 : vector<32x32xf32>
    %cst_37 = arith.constant dense<0.000000e+00> : vector<32x32xf32>
    %69 = tpu.matmul %68, %2, %cst_37 {dimension_numbers = #tpu.dot_dimension_numbers<[1], [0], [0], [1], [0, 0, 1, 1], [], []>} : vector<32x32xf32>, vector<32x32xf32>, vector<32x32xf32> -> vector<32x32xf32>
    %70 = arith.addf %22, %69 : vector<32x32xf32>
    %71 = vector.broadcast %9 : vector<1x32xf32> to vector<32x32xf32>
    %72 = arith.addf %70, %71 : vector<32x32xf32>
    %cst_38 = arith.constant dense<0.000000e+00> : vector<32xf32>
    %73 = vector.multi_reduction <add>, %72, %cst_38 [1] : vector<32x32xf32> to vector<32xf32>
    %74 = vector.shape_cast %73 : vector<32xf32> to vector<32x1xf32>
    %cst_39 = arith.constant 3.200000e+01 : f32
    %75 = vector.broadcast %cst_39 : f32 to vector<32x1xf32>
    %76 = arith.divf %74, %75 : vector<32x1xf32>
    %77 = vector.broadcast %76 : vector<32x1xf32> to vector<32x32xf32>
    %78 = arith.subf %72, %77 : vector<32x32xf32>
    %79 = arith.mulf %78, %78 : vector<32x32xf32>
    %cst_40 = arith.constant dense<0.000000e+00> : vector<32xf32>
    %80 = vector.multi_reduction <add>, %79, %cst_40 [1] : vector<32x32xf32> to vector<32xf32>
    %81 = vector.shape_cast %80 : vector<32xf32> to vector<32x1xf32>
    %cst_41 = arith.constant 3.200000e+01 : f32
    %82 = vector.broadcast %cst_41 : f32 to vector<32x1xf32>
    %83 = arith.divf %81, %82 : vector<32x1xf32>
    %84 = vector.broadcast %76 : vector<32x1xf32> to vector<32x32xf32>
    %85 = arith.subf %72, %84 : vector<32x32xf32>
    %cst_42 = arith.constant 9.99999974E-6 : f32
    %86 = vector.broadcast %cst_42 : f32 to vector<32x1xf32>
    %87 = arith.addf %83, %86 : vector<32x1xf32>
    %88 = math.rsqrt %87 : vector<32x1xf32>
    %89 = vector.broadcast %88 : vector<32x1xf32> to vector<32x32xf32>
    %90 = arith.mulf %85, %89 : vector<32x32xf32>
    %91 = vector.broadcast %12 : vector<1x32xf32> to vector<32x32xf32>
    %92 = arith.mulf %90, %91 : vector<32x32xf32>
    %93 = vector.broadcast %13 : vector<1x32xf32> to vector<32x32xf32>
    %94 = arith.addf %92, %93 : vector<32x32xf32>
    %cst_43 = arith.constant dense<0.000000e+00> : vector<32x64xf32>
    %95 = tpu.matmul %94, %3, %cst_43 {dimension_numbers = #tpu.dot_dimension_numbers<[1], [0], [0], [1], [0, 0, 1, 1], [], []>} : vector<32x32xf32>, vector<32x64xf32>, vector<32x64xf32> -> vector<32x64xf32>
    %96 = vector.broadcast %8 : vector<1x64xf32> to vector<32x64xf32>
    %97 = arith.addf %95, %96 : vector<32x64xf32>
    %cst_44 = arith.constant 0.000000e+00 : f32
    %98 = vector.broadcast %cst_44 : f32 to vector<32x64xf32>
    %99 = arith.maximumf %97, %98 : vector<32x64xf32>
    %cst_45 = arith.constant dense<0.000000e+00> : vector<32x32xf32>
    %100 = tpu.matmul %99, %4, %cst_45 {dimension_numbers = #tpu.dot_dimension_numbers<[1], [1], [0], [0], [0, 0, 1, 0], [], []>} : vector<32x64xf32>, vector<32x64xf32>, vector<32x32xf32> -> vector<32x32xf32>
    %101 = arith.addf %72, %100 : vector<32x32xf32>
    %102 = vector.broadcast %14 : vector<1x32xf32> to vector<32x32xf32>
    %103 = arith.addf %101, %102 : vector<32x32xf32>
    %cst_46 = arith.constant dense<0.000000e+00> : vector<32xf32>
    %104 = vector.multi_reduction <add>, %103, %cst_46 [1] : vector<32x32xf32> to vector<32xf32>
    %105 = vector.shape_cast %104 : vector<32xf32> to vector<32x1xf32>
    %cst_47 = arith.constant 3.200000e+01 : f32
    %106 = vector.broadcast %cst_47 : f32 to vector<32x1xf32>
    %107 = arith.divf %105, %106 : vector<32x1xf32>
    %108 = vector.broadcast %107 : vector<32x1xf32> to vector<32x32xf32>
    %109 = arith.subf %103, %108 : vector<32x32xf32>
    %110 = arith.mulf %109, %109 : vector<32x32xf32>
    %cst_48 = arith.constant dense<0.000000e+00> : vector<32xf32>
    %111 = vector.multi_reduction <add>, %110, %cst_48 [1] : vector<32x32xf32> to vector<32xf32>
    %112 = vector.shape_cast %111 : vector<32xf32> to vector<32x1xf32>
    %cst_49 = arith.constant 3.200000e+01 : f32
    %113 = vector.broadcast %cst_49 : f32 to vector<32x1xf32>
    %114 = arith.divf %112, %113 : vector<32x1xf32>
    %115 = vector.broadcast %107 : vector<32x1xf32> to vector<32x32xf32>
    %116 = arith.subf %103, %115 : vector<32x32xf32>
    %cst_50 = arith.constant 9.99999974E-6 : f32
    %117 = vector.broadcast %cst_50 : f32 to vector<32x1xf32>
    %118 = arith.addf %114, %117 : vector<32x1xf32>
    %119 = math.rsqrt %118 : vector<32x1xf32>
    %120 = vector.broadcast %119 : vector<32x1xf32> to vector<32x32xf32>
    %121 = arith.mulf %116, %120 : vector<32x32xf32>
    %122 = vector.broadcast %10 : vector<1x32xf32> to vector<32x32xf32>
    %123 = arith.mulf %121, %122 : vector<32x32xf32>
    %124 = vector.broadcast %11 : vector<1x32xf32> to vector<32x32xf32>
    %125 = arith.addf %123, %124 : vector<32x32xf32>
    %cst_51 = arith.constant dense<0.000000e+00> : vector<32x96xf32>
    %126 = tpu.matmul %125, %1, %cst_51 {dimension_numbers = #tpu.dot_dimension_numbers<[1], [0], [0], [1], [0, 0, 1, 1], [], []>} : vector<32x32xf32>, vector<32x96xf32>, vector<32x96xf32> -> vector<32x96xf32>
    %127 = vector.broadcast %7 : vector<1x96xf32> to vector<32x96xf32>
    %128 = arith.addf %126, %127 : vector<32x96xf32>
    %129 = vector.extract_strided_slice %128 {offsets = [0, 0], sizes = [32, 32], strides = [1, 1]} : vector<32x96xf32> to vector<32x32xf32>
    %130 = vector.extract_strided_slice %128 {offsets = [0, 32], sizes = [32, 32], strides = [1, 1]} : vector<32x96xf32> to vector<32x32xf32>
    %131 = vector.extract_strided_slice %128 {offsets = [0, 64], sizes = [32, 32], strides = [1, 1]} : vector<32x96xf32> to vector<32x32xf32>
    %132 = tpu.concatenate %130, %130, %130, %130, %130, %130, %130, %130 in 0 : vector<32x32xf32>, vector<32x32xf32>, vector<32x32xf32>, vector<32x32xf32>, vector<32x32xf32>, vector<32x32xf32>, vector<32x32xf32>, vector<32x32xf32> -> vector<256x32xf32>
    %133 = arith.mulf %132, %15 : vector<256x32xf32>
    %134 = tpu.concatenate %131, %131, %131, %131, %131, %131, %131, %131 in 0 : vector<32x32xf32>, vector<32x32xf32>, vector<32x32xf32>, vector<32x32xf32>, vector<32x32xf32>, vector<32x32xf32>, vector<32x32xf32>, vector<32x32xf32> -> vector<256x32xf32>
    %135 = arith.mulf %134, %15 : vector<256x32xf32>
    %cst_52 = arith.constant dense<0.000000e+00> : vector<32x256xf32>
    %136 = tpu.matmul %129, %133, %cst_52 {dimension_numbers = #tpu.dot_dimension_numbers<[1], [1], [0], [0], [0, 0, 1, 0], [], []>} : vector<32x32xf32>, vector<256x32xf32>, vector<32x256xf32> -> vector<32x256xf32>
    %cst_53 = arith.constant 5.000000e-01 : f32
    %137 = vector.broadcast %cst_53 : f32 to vector<32x256xf32>
    %138 = arith.cmpf ogt, %0, %137 : vector<32x256xf32>
    %cst_54 = arith.constant -1.000000e+30 : f32
    %139 = vector.broadcast %cst_54 : f32 to vector<32x256xf32>
    %140 = arith.select %138, %136, %139 : vector<32x256xi1>, vector<32x256xf32>
    %cst_55 = arith.constant dense<0xFF800000> : vector<32xf32>
    %141 = vector.multi_reduction <maximumf>, %140, %cst_55 [1] : vector<32x256xf32> to vector<32xf32>
    %142 = vector.shape_cast %141 : vector<32xf32> to vector<32x1xf32>
    %143 = vector.broadcast %142 : vector<32x1xf32> to vector<32x256xf32>
    %144 = arith.subf %140, %143 : vector<32x256xf32>
    %145 = math.exp %144 : vector<32x256xf32>
    %146 = arith.mulf %145, %0 : vector<32x256xf32>
    %cst_56 = arith.constant dense<0.000000e+00> : vector<32x32xf32>
    %147 = tpu.matmul %146, %135, %cst_56 {dimension_numbers = #tpu.dot_dimension_numbers<[1], [0], [0], [1], [0, 0, 1, 1], [], []>} : vector<32x256xf32>, vector<256x32xf32>, vector<32x32xf32> -> vector<32x32xf32>
    %cst_57 = arith.constant dense<0.000000e+00> : vector<32x32xf32>
    %148 = tpu.matmul %146, %15, %cst_57 {dimension_numbers = #tpu.dot_dimension_numbers<[1], [0], [0], [1], [0, 0, 1, 1], [], []>} : vector<32x256xf32>, vector<256x32xf32>, vector<32x32xf32> -> vector<32x32xf32>
    %149 = arith.divf %147, %148 : vector<32x32xf32>
    %cst_58 = arith.constant dense<0.000000e+00> : vector<32x32xf32>
    %150 = tpu.matmul %149, %2, %cst_58 {dimension_numbers = #tpu.dot_dimension_numbers<[1], [0], [0], [1], [0, 0, 1, 1], [], []>} : vector<32x32xf32>, vector<32x32xf32>, vector<32x32xf32> -> vector<32x32xf32>
    %151 = arith.addf %103, %150 : vector<32x32xf32>
    %152 = vector.broadcast %9 : vector<1x32xf32> to vector<32x32xf32>
    %153 = arith.addf %151, %152 : vector<32x32xf32>
    %cst_59 = arith.constant dense<0.000000e+00> : vector<32xf32>
    %154 = vector.multi_reduction <add>, %153, %cst_59 [1] : vector<32x32xf32> to vector<32xf32>
    %155 = vector.shape_cast %154 : vector<32xf32> to vector<32x1xf32>
    %cst_60 = arith.constant 3.200000e+01 : f32
    %156 = vector.broadcast %cst_60 : f32 to vector<32x1xf32>
    %157 = arith.divf %155, %156 : vector<32x1xf32>
    %158 = vector.broadcast %157 : vector<32x1xf32> to vector<32x32xf32>
    %159 = arith.subf %153, %158 : vector<32x32xf32>
    %160 = arith.mulf %159, %159 : vector<32x32xf32>
    %cst_61 = arith.constant dense<0.000000e+00> : vector<32xf32>
    %161 = vector.multi_reduction <add>, %160, %cst_61 [1] : vector<32x32xf32> to vector<32xf32>
    %162 = vector.shape_cast %161 : vector<32xf32> to vector<32x1xf32>
    %cst_62 = arith.constant 3.200000e+01 : f32
    %163 = vector.broadcast %cst_62 : f32 to vector<32x1xf32>
    %164 = arith.divf %162, %163 : vector<32x1xf32>
    %165 = vector.broadcast %157 : vector<32x1xf32> to vector<32x32xf32>
    %166 = arith.subf %153, %165 : vector<32x32xf32>
    %cst_63 = arith.constant 9.99999974E-6 : f32
    %167 = vector.broadcast %cst_63 : f32 to vector<32x1xf32>
    %168 = arith.addf %164, %167 : vector<32x1xf32>
    %169 = math.rsqrt %168 : vector<32x1xf32>
    %170 = vector.broadcast %169 : vector<32x1xf32> to vector<32x32xf32>
    %171 = arith.mulf %166, %170 : vector<32x32xf32>
    %172 = vector.broadcast %12 : vector<1x32xf32> to vector<32x32xf32>
    %173 = arith.mulf %171, %172 : vector<32x32xf32>
    %174 = vector.broadcast %13 : vector<1x32xf32> to vector<32x32xf32>
    %175 = arith.addf %173, %174 : vector<32x32xf32>
    %cst_64 = arith.constant dense<0.000000e+00> : vector<32x64xf32>
    %176 = tpu.matmul %175, %3, %cst_64 {dimension_numbers = #tpu.dot_dimension_numbers<[1], [0], [0], [1], [0, 0, 1, 1], [], []>} : vector<32x32xf32>, vector<32x64xf32>, vector<32x64xf32> -> vector<32x64xf32>
    %177 = vector.broadcast %8 : vector<1x64xf32> to vector<32x64xf32>
    %178 = arith.addf %176, %177 : vector<32x64xf32>
    %cst_65 = arith.constant 0.000000e+00 : f32
    %179 = vector.broadcast %cst_65 : f32 to vector<32x64xf32>
    %180 = arith.maximumf %178, %179 : vector<32x64xf32>
    %cst_66 = arith.constant dense<0.000000e+00> : vector<32x32xf32>
    %181 = tpu.matmul %180, %4, %cst_66 {dimension_numbers = #tpu.dot_dimension_numbers<[1], [1], [0], [0], [0, 0, 1, 0], [], []>} : vector<32x64xf32>, vector<32x64xf32>, vector<32x32xf32> -> vector<32x32xf32>
    %182 = arith.addf %153, %181 : vector<32x32xf32>
    %183 = vector.broadcast %14 : vector<1x32xf32> to vector<32x32xf32>
    %184 = arith.addf %182, %183 : vector<32x32xf32>
    %cst_67 = arith.constant dense<0.000000e+00> : vector<32x32xf32>
    %185 = tpu.matmul %6, %184, %cst_67 {dimension_numbers = #tpu.dot_dimension_numbers<[1], [1], [0], [0], [0, 0, 1, 0], [], []>} : vector<32x32xf32>, vector<32x32xf32>, vector<32x32xf32> -> vector<32x32xf32>
    %186 = vector.extract_strided_slice %185 {offsets = [0, 0], sizes = [32, 16], strides = [1, 1]} : vector<32x32xf32> to vector<32x16xf32>
    %c0_68 = arith.constant 0 : index
    %c0_69 = arith.constant 0 : index
    %c0_70 = arith.constant 0 : index
    %187 = vector.load %arg3[%c0_68, %c0_69, %c0_70] : memref<2x32x16xf32, #tpu.memory_space<vmem>>, vector<1x32x16xf32>
    %188 = vector.shape_cast %187 : vector<1x32x16xf32> to vector<32x16xf32>
    %189 = vector.shape_cast %186 : vector<32x16xf32> to vector<1x32x16xf32>
    tpu.vector_store %arg3[%c0_68, %c0_69, %c0_70], %189 {strides = array<i32>} : memref<2x32x16xf32, #tpu.memory_space<vmem>>, vector<1x32x16xf32>,
    %190 = vector.extract_strided_slice %185 {offsets = [0, 16], sizes = [32, 16], strides = [1, 1]} : vector<32x32xf32> to vector<32x16xf32>
    %c1_71 = arith.constant 1 : index
    %c0_72 = arith.constant 0 : index
    %c0_73 = arith.constant 0 : index
    %191 = vector.load %arg3[%c1_71, %c0_72, %c0_73] : memref<2x32x16xf32, #tpu.memory_space<vmem>>, vector<1x32x16xf32>
    %192 = vector.shape_cast %191 : vector<1x32x16xf32> to vector<32x16xf32>
    %193 = vector.shape_cast %190 : vector<32x16xf32> to vector<1x32x16xf32>
    tpu.vector_store %arg3[%c1_71, %c0_72, %c0_73], %193 {strides = array<i32>} : memref<2x32x16xf32, #tpu.memory_space<vmem>>, vector<1x32x16xf32>,
    return
  }
}

</mosaic_0001>

<llo_original>
// kernel: trans_en_forward.1
$region0: #{trans_en_forward.1}
  #allocation0 [shape = 'u32[]', space=smem, size = 0x4, offset = 0x4, fixed_abs, tag = 'smem constant byte address 0x4 - core index']
  #allocation1 [shape = 'u32[144,128]{1,0:T(1,128)}', space=vmem, size = 0x12000, scoped, tag = 'internal scratch']
  %s0 = inlined_call_operand.vmem [shape: f32[2,32,16], index: 0, kind: input, shape index: {}]
  %s1 = inlined_call_operand.vmem [shape: f32[32,672], index: 1, kind: input, shape index: {}]
  %s2 = inlined_call_operand.vmem [shape: f32[256,32], index: 2, kind: input, shape index: {}]
  %s3 = inlined_call_operand.vmem [shape: f32[2,32,16], index: 3, kind: output, shape index: {}]
  %s4 = sld [smem:[#allocation0]]
  $region22: #{trans_en_forward.1} parent=0
    _
  %s6 = ssub.s32 1, %s4
  %s7 = scalar_select 0, %s6, %s4
  // Predicated region
  $region2: #{trans_en_forward.1} parent=0 // pred_check
    _
  $region3: #{trans_en_forward.1} parent=0 // pred_check_branch
    %9 = sbr.rel (0) target = $region5
  $region4: #{trans_en_forward.1} parent=0 // pred_region
    _
  $region5: #{trans_en_forward.1} parent=0 // pred_fallthru
    _
  // Predicated region
  $region6: #{trans_en_forward.1} parent=0 // pred_check
    _
  $region7: #{trans_en_forward.1} parent=0 // pred_check_branch
    %11 = sbr.rel (0) target = $region9
  $region8: #{trans_en_forward.1} parent=0 // pred_region
    _
  $region9: #{trans_en_forward.1} parent=0 // pred_fallthru
    _
  // Predicated region
  $region10: #{trans_en_forward.1} parent=0 // pred_check
    _
  $region11: #{trans_en_forward.1} parent=0 // pred_check_branch
    %13 = sbr.rel (0) target = $region13
  $region12: #{trans_en_forward.1} parent=0 // pred_region
    _
  $region13: #{trans_en_forward.1} parent=0 // pred_fallthru
    _
  %v14 = vld [vmem:[%s1] sm:$0xff]
  %v15 = vld [vmem:[%s1 + $0x8] sm:$0xff]
  %v16 = vld [vmem:[%s1 + $0x30] sm:$0xff]
  %v17 = vld [vmem:[%s1 + $0x38] sm:$0xff]
  %v18 = vld [vmem:[%s1 + $0x60] sm:$0xff]
  %v19 = vld [vmem:[%s1 + $0x68] sm:$0xff]
  %v20 = vld [vmem:[%s1 + $0x90] sm:$0xff]
  %v21 = vld [vmem:[%s1 + $0x98] sm:$0xff]
  %v22 = vld [vmem:[%s1 + $0x10] sm:$0xff]
  %v23 = vld [vmem:[%s1 + $0x40] sm:$0xff]
  %v24 = vld [vmem:[%s1 + $0x70] sm:$0xff]
  %v25 = vld [vmem:[%s1 + $0xa0] sm:$0xff]
  %v26 = vld [vmem:[%s1 + $0x18] sm:$0xff]
  %v27 = vld [vmem:[%s1 + $0x48] sm:$0xff]
  %v28 = vld [vmem:[%s1 + $0x78] sm:$0xff]
  %v29 = vld [vmem:[%s1 + $0xa8] sm:$0xff]
  %v30 = vld [vmem:[%s1 + $0x20] sm:$0xff]
  %v31 = vld [vmem:[%s1 + $0x50] sm:$0xff]
  %v32 = vld [vmem:[%s1 + $0x80] sm:$0xff]
  %v33 = vld [vmem:[%s1 + $0xb0] sm:$0xff]
  %v34 = vld [vmem:[%s1 + $0x28] sm:$0xff]
  %v35 = vld [vmem:[%s1 + $0x58] sm:$0xff]
  %v36 = vld [vmem:[%s1 + $0x88] sm:$0xff]
  %v37 = vld [vmem:[%s1 + $0xb8] sm:$0xff]
  %v38 = vld [vmem:[%s1 + $0x20] ss:$0 sm:$0xff]
  %v39 = vld [vmem:[%s1 + $0x21] ss:$0 sm:$0xff]
  %v40 = vld [vmem:[%s1 + $0x22] ss:$0 sm:$0xff]
  %v41 = vld [vmem:[%s1 + $0x23] ss:$0 sm:$0xff]
  %v42 = vld [vmem:[%s2] sm:$0xff]
  %v43 = vld [vmem:[%s2 + $0x8] sm:$0xff]
  %v44 = vld [vmem:[%s2 + $0x10] sm:$0xff]
  %v45 = vld [vmem:[%s2 + $0x18] sm:$0xff]
  %v46 = vld [vmem:[%s2 + $0x20] sm:$0xff]
  %v47 = vld [vmem:[%s2 + $0x28] sm:$0xff]
  %v48 = vld [vmem:[%s2 + $0x30] sm:$0xff]
  %v49 = vld [vmem:[%s2 + $0x38] sm:$0xff]
  %v50 = vld [vmem:[%s2 + $0x40] sm:$0xff]
  %v51 = vld [vmem:[%s2 + $0x48] sm:$0xff]
  %v52 = vld [vmem:[%s2 + $0x50] sm:$0xff]
  %v53 = vld [vmem:[%s2 + $0x58] sm:$0xff]
  %v54 = vld [vmem:[%s2 + $0x60] sm:$0xff]
  %v55 = vld [vmem:[%s2 + $0x68] sm:$0xff]
  %v56 = vld [vmem:[%s2 + $0x70] sm:$0xff]
  %v57 = vld [vmem:[%s2 + $0x78] sm:$0xff]
  %v58 = vld [vmem:[%s2 + $0x80] sm:$0xff]
  %v59 = vld [vmem:[%s2 + $0x88] sm:$0xff]
  %v60 = vld [vmem:[%s2 + $0x90] sm:$0xff]
  %v61 = vld [vmem:[%s2 + $0x98] sm:$0xff]
  %v62 = vld [vmem:[%s2 + $0xa0] sm:$0xff]
  %v63 = vld [vmem:[%s2 + $0xa8] sm:$0xff]
  %v64 = vld [vmem:[%s2 + $0xb0] sm:$0xff]
  %v65 = vld [vmem:[%s2 + $0xb8] sm:$0xff]
  %v66 = vld [vmem:[%s2 + $0xc0] sm:$0xff]
  %v67 = vld [vmem:[%s2 + $0xc8] sm:$0xff]
  %v68 = vld [vmem:[%s2 + $0xd0] sm:$0xff]
  %v69 = vld [vmem:[%s2 + $0xd8] sm:$0xff]
  %v70 = vld [vmem:[%s2 + $0xe0] sm:$0xff]
  %v71 = vld [vmem:[%s2 + $0xe8] sm:$0xff]
  %v72 = vld [vmem:[%s2 + $0xf0] sm:$0xff]
  %v73 = vld [vmem:[%s2 + $0xf8] sm:$0xff]
  %v74 = vld [vmem:[%s0] sm:$0xff]
  %v75 = vld [vmem:[%s0 + $0x8] sm:$0xff]
  %v76 = vld [vmem:[%s0 + $0x10] sm:$0xff]
  %v77 = vld [vmem:[%s0 + $0x18] sm:$0xff]
  %s78 = scalar_lea.vmem %s0, 32
  %v79 = vld [vmem:[%s78] sm:$0xff]
  %v80 = vld [vmem:[%s78 + $0x8] sm:$0xff]
  %v81 = vld [vmem:[%s78 + $0x10] sm:$0xff]
  %v82 = vld [vmem:[%s78 + $0x18] sm:$0xff]
  %87 = vrot.lane.b32.xlu0 %v79, 16
  %v88 = vpop.permute.xlu0 %87
  %89 = vrot.lane.b32.xlu0 %v80, 16
  %v90 = vpop.permute.xlu0 %89
  %91 = vrot.lane.b32.xlu0 %v81, 16
  %v92 = vpop.permute.xlu0 %91
  %93 = vrot.lane.b32.xlu0 %v82, 16
  %v94 = vpop.permute.xlu0 %93
  %vm99 = vcmask 130048
  %v100 = vsel %vm99, %v74, %v88
  %v101 = vsel %vm99, %v75, %v90
  %v102 = vsel %vm99, %v76, %v92
  %v103 = vsel %vm99, %v77, %v94
  %108 = vrot.lane.b32.xlu0 %v30, 32
  %v109 = vpop.permute.xlu0 %108
  %110 = vrot.lane.b32.xlu0 %v31, 32
  %v111 = vpop.permute.xlu0 %110
  %112 = vrot.lane.b32.xlu0 %v32, 32
  %v113 = vpop.permute.xlu0 %112
  %114 = vrot.lane.b32.xlu0 %v33, 32
  %v115 = vpop.permute.xlu0 %114
  %v120 = vadd.f32 %v100, %v109
  %v121 = vadd.f32 %v101, %v111
  %v122 = vadd.f32 %v102, %v113
  %v123 = vadd.f32 %v103, %v115
  %vm124 = vcmask 261120
  %v126 = vsel %vm124, %v34, 0
  %v129 = vsel %vm124, %v35, 0
  %v132 = vsel %vm124, %v36, 0
  %v135 = vsel %vm124, %v37, 0
  %v138 = vsel %vm124, %v120, 0
  %v141 = vsel %vm124, %v121, 0
  %v144 = vsel %vm124, %v122, 0
  %v147 = vsel %vm124, %v123, 0
  %149 = vmatprep.subr.mxu0 0.0
  %150 = vmatpush1.xpose.msra.mxu0 %v138
  %151 = vmatprep.subr.mxu0 0.0
  %152 = vmatpush1.xpose.msra.mxu0 %v141
  %153 = vmatprep.subr.mxu0 0.0
  %154 = vmatpush1.xpose.msra.mxu0 %v144
  %155 = vmatprep.subr.mxu0 0.0
  %156 = vmatpush1.xpose.msra.mxu0 %v147
  %157 = vmatprep.subr.mxu0 0.0
  %158 = vmatpush1.xpose.msra.mxu0 0.0
  %159 = vmatprep.subr.mxu0 0.0
  %160 = vmatpush1.xpose.msra.mxu0 0.0
  %161 = vmatprep.subr.mxu0 0.0
  %162 = vmatpush1.xpose.msra.mxu0 0.0
  %163 = vmatprep.subr.mxu0 0.0
  %164 = vmatpush1.xpose.msra.mxu0 0.0
  %165 = vmatprep.subr.mxu0 0.0
  %166 = vmatpush1.xpose.msra.mxu0 0.0
  %167 = vmatprep.subr.mxu0 0.0
  %168 = vmatpush1.xpose.msra.mxu0 0.0
  %169 = vmatprep.subr.mxu0 0.0
  %170 = vmatpush1.xpose.msra.mxu0 0.0
  %171 = vmatprep.subr.mxu0 0.0
  %172 = vmatpush1.xpose.msra.mxu0 0.0
  %173 = vmatprep.subr.mxu0 0.0
  %174 = vmatpush1.xpose.msra.mxu0 0.0
  %175 = vmatprep.subr.mxu0 0.0
  %176 = vmatpush1.xpose.msra.mxu0 0.0
  %177 = vmatprep.subr.mxu0 0.0
  %178 = vmatpush1.xpose.msra.mxu0 0.0
  %179 = vmatprep.subr.mxu0 0.0
  %180 = vmatpush1.xpose.msra.mxu0 0.0
  %181 = vmatprep.subr.mxu0 0.0
  %182 = vmatpush1.xpose.msra.mxu0 0.0
  %183 = vmatprep.subr.mxu0 0.0
  %184 = vmatpush1.xpose.msra.mxu0 0.0
  %185 = vmatprep.subr.mxu0 0.0
  %186 = vmatpush1.xpose.msra.mxu0 0.0
  %187 = vmatprep.subr.mxu0 0.0
  %188 = vmatpush1.xpose.msra.mxu0 0.0
  %189 = vmatprep.subr.mxu0 0.0
  %190 = vmatpush1.xpose.msra.mxu0 0.0
  %191 = vmatprep.subr.mxu0 0.0
  %192 = vmatpush1.xpose.msra.mxu0 0.0
  %193 = vmatprep.subr.mxu0 0.0
  %194 = vmatpush1.xpose.msra.mxu0 0.0
  %195 = vmatprep.subr.mxu0 0.0
  %196 = vmatpush1.xpose.msra.mxu0 0.0
  %197 = vmatprep.subr.mxu0 0.0
  %198 = vmatpush1.xpose.msra.mxu0 0.0
  %199 = vmatprep.subr.mxu0 0.0
  %200 = vmatpush1.xpose.msra.mxu0 0.0
  %201 = vmatprep.subr.mxu0 0.0
  %202 = vmatpush1.xpose.msra.mxu0 0.0
  %203 = vmatprep.subr.mxu0 0.0
  %204 = vmatpush1.xpose.msra.mxu0 0.0
  %205 = vmatprep.subr.mxu0 0.0
  %206 = vmatpush1.xpose.msra.mxu0 0.0
  %207 = vmatprep.subr.mxu0 0.0
  %208 = vmatpush1.xpose.msra.mxu0 0.0
  %209 = vmatprep.subr.mxu0 0.0
  %210 = vmatpush1.xpose.msra.mxu0 0.0
  %211 = vmatprep.subr.mxu0 0.0
  %212 = vmatpush1.xpose.msra.mxu0 0.0
  %213 = vmatprep.mubr.f32.mxu0 0.0
  %214 = vmatmul.mubr.f32.gmra.mrb[0].mxu0 %v126
  %v215 = vpop.f32.mrb[0].mxu0
  %v216 = vadd.f32 0.0, %v215
  %v217 = vpop.f32.mrb[0].mxu0
  %218 = vmatprep.mubr.f32.mxu0 0.0
  %219 = vmatmul.mubr.f32.gmra.mrb[0].mxu0 %v129
  %v220 = vpop.f32.mrb[0].mxu0
  %v221 = vadd.f32 0.0, %v220
  %v222 = vpop.f32.mrb[0].mxu0
  %223 = vmatprep.mubr.f32.mxu0 0.0
  %224 = vmatmul.mubr.f32.gmra.mrb[0].mxu0 %v132
  %v225 = vpop.f32.mrb[0].mxu0
  %v226 = vadd.f32 0.0, %v225
  %v227 = vpop.f32.mrb[0].mxu0
  %228 = vmatprep.mubr.f32.mxu0 0.0
  %229 = vmatmul.mubr.f32.gmra.mrb[0].mxu0 %v135
  %v230 = vpop.f32.mrb[0].mxu0
  %v231 = vadd.f32 0.0, %v230
  %v232 = vpop.f32.mrb[0].mxu0
  %233 = vdwg.mxu0
  %v234 = vsel %vm124, %v216, 0.0
  %235 = vadd.xlane.f32.xlu0 %v234
  %v236 = vpop.xlane.xlu0 %235
  %v237 = vsel %vm124, %v221, 0.0
  %238 = vadd.xlane.f32.xlu0 %v237
  %v239 = vpop.xlane.xlu0 %238
  %v240 = vsel %vm124, %v226, 0.0
  %241 = vadd.xlane.f32.xlu0 %v240
  %v242 = vpop.xlane.xlu0 %241
  %v243 = vsel %vm124, %v231, 0.0
  %244 = vadd.xlane.f32.xlu0 %v243
  %v245 = vpop.xlane.xlu0 %244
  %v246 = vrcp.pop 32.0
  %v247 = vmul.f32 %v236, %v246
  %v248 = vmul.f32 %v239, %v246
  %v249 = vmul.f32 %v242, %v246
  %v250 = vmul.f32 %v245, %v246
  %v251 = vsub.f32 %v216, %v247
  %v252 = vsub.f32 %v221, %v248
  %v253 = vsub.f32 %v226, %v249
  %v254 = vsub.f32 %v231, %v250
  %v255 = vmul.f32 %v251, %v251
  %v256 = vmul.f32 %v252, %v252
  %v257 = vmul.f32 %v253, %v253
  %v258 = vmul.f32 %v254, %v254
  %v259 = vsel %vm124, %v255, 0.0
  %260 = vadd.xlane.f32.xlu0 %v259
  %v261 = vpop.xlane.xlu0 %260
  %v262 = vsel %vm124, %v256, 0.0
  %263 = vadd.xlane.f32.xlu0 %v262
  %v264 = vpop.xlane.xlu0 %263
  %v265 = vsel %vm124, %v257, 0.0
  %266 = vadd.xlane.f32.xlu0 %v265
  %v267 = vpop.xlane.xlu0 %266
  %v268 = vsel %vm124, %v258, 0.0
  %269 = vadd.xlane.f32.xlu0 %v268
  %v270 = vpop.xlane.xlu0 %269
  %v271 = vmul.f32 %v261, %v246
  %v272 = vmul.f32 %v264, %v246
  %v273 = vmul.f32 %v267, %v246
  %v274 = vmul.f32 %v270, %v246
  %v275 = vadd.f32 %v271, 1e-05
  %v276 = vadd.f32 %v272, 1e-05
  %v277 = vadd.f32 %v273, 1e-05
  %v278 = vadd.f32 %v274, 1e-05
  %v279 = vrsqrt.pop %v275
  %v280 = vrsqrt.pop %v276
  %v281 = vrsqrt.pop %v277
  %v282 = vrsqrt.pop %v278
  %v283 = vmul.f32 %v251, %v279
  %v284 = vmul.f32 %v252, %v280
  %v285 = vmul.f32 %v253, %v281
  %v286 = vmul.f32 %v254, %v282
  %288 = vrot.lane.b32.xlu0 %v40, 96
  %v289 = vpop.permute.xlu0 %288
  %v291 = vmul.f32 %v283, %v289
  %v292 = vmul.f32 %v284, %v289
  %v293 = vmul.f32 %v285, %v289
  %v294 = vmul.f32 %v286, %v289
  %295 = vrot.lane.b32.xlu0 %v40, 64
  %v296 = vpop.permute.xlu0 %295
  %v298 = vadd.f32 %v291, %v296
  %v299 = vadd.f32 %v292, %v296
  %v300 = vadd.f32 %v293, %v296
  %v301 = vadd.f32 %v294, %v296
  %v303 = vsel %vm124, %v298, 0
  %v306 = vsel %vm124, %v299, 0
  %v309 = vsel %vm124, %v300, 0
  %v312 = vsel %vm124, %v301, 0
  %314 = vmatprep.subr.mxu0 0.0
  %315 = vmatpush1.msra.mxu0 %v22
  %316 = vmatprep.subr.mxu0 0.0
  %317 = vmatpush1.msra.mxu0 %v23
  %318 = vmatprep.subr.mxu0 0.0
  %319 = vmatpush1.msra.mxu0 %v24
  %320 = vmatprep.subr.mxu0 0.0
  %321 = vmatpush1.msra.mxu0 %v25
  %322 = vmatprep.subr.mxu0 0.0
  %323 = vmatpush1.msra.mxu0 0.0
  %324 = vmatprep.subr.mxu0 0.0
  %325 = vmatpush1.msra.mxu0 0.0
  %326 = vmatprep.subr.mxu0 0.0
  %327 = vmatpush1.msra.mxu0 0.0
  %328 = vmatprep.subr.mxu0 0.0
  %329 = vmatpush1.msra.mxu0 0.0
  %330 = vmatprep.subr.mxu0 0.0
  %331 = vmatpush1.msra.mxu0 0.0
  %332 = vmatprep.subr.mxu0 0.0
  %333 = vmatpush1.msra.mxu0 0.0
  %334 = vmatprep.subr.mxu0 0.0
  %335 = vmatpush1.msra.mxu0 0.0
  %336 = vmatprep.subr.mxu0 0.0
  %337 = vmatpush1.msra.mxu0 0.0
  %338 = vmatprep.subr.mxu0 0.0
  %339 = vmatpush1.msra.mxu0 0.0
  %340 = vmatprep.subr.mxu0 0.0
  %341 = vmatpush1.msra.mxu0 0.0
  %342 = vmatprep.subr.mxu0 0.0
  %343 = vmatpush1.msra.mxu0 0.0
  %344 = vmatprep.subr.mxu0 0.0
  %345 = vmatpush1.msra.mxu0 0.0
  %346 = vmatprep.subr.mxu0 0.0
  %347 = vmatpush1.msra.mxu0 0.0
  %348 = vmatprep.subr.mxu0 0.0
  %349 = vmatpush1.msra.mxu0 0.0
  %350 = vmatprep.subr.mxu0 0.0
  %351 = vmatpush1.msra.mxu0 0.0
  %352 = vmatprep.subr.mxu0 0.0
  %353 = vmatpush1.msra.mxu0 0.0
  %354 = vmatprep.subr.mxu0 0.0
  %355 = vmatpush1.msra.mxu0 0.0
  %356 = vmatprep.subr.mxu0 0.0
  %357 = vmatpush1.msra.mxu0 0.0
  %358 = vmatprep.subr.mxu0 0.0
  %359 = vmatpush1.msra.mxu0 0.0
  %360 = vmatprep.subr.mxu0 0.0
  %361 = vmatpush1.msra.mxu0 0.0
  %362 = vmatprep.subr.mxu0 0.0
  %363 = vmatpush1.msra.mxu0 0.0
  %364 = vmatprep.subr.mxu0 0.0
  %365 = vmatpush1.msra.mxu0 0.0
  %366 = vmatprep.subr.mxu0 0.0
  %367 = vmatpush1.msra.mxu0 0.0
  %368 = vmatprep.subr.mxu0 0.0
  %369 = vmatpush1.msra.mxu0 0.0
  %370 = vmatprep.subr.mxu0 0.0
  %371 = vmatpush1.msra.mxu0 0.0
  %372 = vmatprep.subr.mxu0 0.0
  %373 = vmatpush1.msra.mxu0 0.0
  %374 = vmatprep.subr.mxu0 0.0
  %375 = vmatpush1.msra.mxu0 0.0
  %376 = vmatprep.subr.mxu0 0.0
  %377 = vmatpush1.msra.mxu0 0.0
  %378 = vmatprep.mubr.f32.mxu0 0.0
  %379 = vmatmul.mubr.f32.gmra.mrb[0].mxu0 %v303
  %v380 = vpop.f32.mrb[0].mxu0
  %v381 = vadd.f32 %v38, %v380
  %v382 = vpop.f32.mrb[0].mxu0
  %383 = vmatprep.mubr.f32.mxu0 0.0
  %384 = vmatmul.mubr.f32.gmra.mrb[0].mxu0 %v306
  %v385 = vpop.f32.mrb[0].mxu0
  %v386 = vadd.f32 %v38, %v385
  %v387 = vpop.f32.mrb[0].mxu0
  %388 = vmatprep.mubr.f32.mxu0 0.0
  %389 = vmatmul.mubr.f32.gmra.mrb[0].mxu0 %v309
  %v390 = vpop.f32.mrb[0].mxu0
  %v391 = vadd.f32 %v38, %v390
  %v392 = vpop.f32.mrb[0].mxu0
  %393 = vmatprep.mubr.f32.mxu0 0.0
  %394 = vmatmul.mubr.f32.gmra.mrb[0].mxu0 %v312
  %v395 = vpop.f32.mrb[0].mxu0
  %v396 = vadd.f32 %v38, %v395
  %v397 = vpop.f32.mrb[0].mxu0
  %398 = vdwg.mxu0
  %431 = vrot.lane.b32.xlu0 %v42, 32
  %v432 = vpop.permute.xlu0 %431
  %433 = vrot.lane.b32.xlu0 %v43, 32
  %v434 = vpop.permute.xlu0 %433
  %435 = vrot.lane.b32.xlu0 %v44, 32
  %v436 = vpop.permute.xlu0 %435
  %437 = vrot.lane.b32.xlu0 %v45, 32
  %v438 = vpop.permute.xlu0 %437
  %439 = vrot.lane.b32.xlu0 %v46, 32
  %v440 = vpop.permute.xlu0 %439
  %441 = vrot.lane.b32.xlu0 %v47, 32
  %v442 = vpop.permute.xlu0 %441
  %443 = vrot.lane.b32.xlu0 %v48, 32
  %v444 = vpop.permute.xlu0 %443
  %445 = vrot.lane.b32.xlu0 %v49, 32
  %v446 = vpop.permute.xlu0 %445
  %447 = vrot.lane.b32.xlu0 %v50, 32
  %v448 = vpop.permute.xlu0 %447
  %449 = vrot.lane.b32.xlu0 %v51, 32
  %v450 = vpop.permute.xlu0 %449
  %451 = vrot.lane.b32.xlu0 %v52, 32
  %v452 = vpop.permute.xlu0 %451
  %453 = vrot.lane.b32.xlu0 %v53, 32
  %v454 = vpop.permute.xlu0 %453
  %455 = vrot.lane.b32.xlu0 %v54, 32
  %v456 = vpop.permute.xlu0 %455
  %457 = vrot.lane.b32.xlu0 %v55, 32
  %v458 = vpop.permute.xlu0 %457
  %459 = vrot.lane.b32.xlu0 %v56, 32
  %v460 = vpop.permute.xlu0 %459
  %461 = vrot.lane.b32.xlu0 %v57, 32
  %v462 = vpop.permute.xlu0 %461
  %463 = vrot.lane.b32.xlu0 %v58, 32
  %v464 = vpop.permute.xlu0 %463
  %465 = vrot.lane.b32.xlu0 %v59, 32
  %v466 = vpop.permute.xlu0 %465
  %467 = vrot.lane.b32.xlu0 %v60, 32
  %v468 = vpop.permute.xlu0 %467
  %469 = vrot.lane.b32.xlu0 %v61, 32
  %v470 = vpop.permute.xlu0 %469
  %471 = vrot.lane.b32.xlu0 %v62, 32
  %v472 = vpop.permute.xlu0 %471
  %473 = vrot.lane.b32.xlu0 %v63, 32
  %v474 = vpop.permute.xlu0 %473
  %475 = vrot.lane.b32.xlu0 %v64, 32
  %v476 = vpop.permute.xlu0 %475
  %477 = vrot.lane.b32.xlu0 %v65, 32
  %v478 = vpop.permute.xlu0 %477
  %479 = vrot.lane.b32.xlu0 %v66, 32
  %v480 = vpop.permute.xlu0 %479
  %481 = vrot.lane.b32.xlu0 %v67, 32
  %v482 = vpop.permute.xlu0 %481
  %483 = vrot.lane.b32.xlu0 %v68, 32
  %v484 = vpop.permute.xlu0 %483
  %485 = vrot.lane.b32.xlu0 %v69, 32
  %v486 = vpop.permute.xlu0 %485
  %487 = vrot.lane.b32.xlu0 %v70, 32
  %v488 = vpop.permute.xlu0 %487
  %489 = vrot.lane.b32.xlu0 %v71, 32
  %v490 = vpop.permute.xlu0 %489
  %491 = vrot.lane.b32.xlu0 %v72, 32
  %v492 = vpop.permute.xlu0 %491
  %493 = vrot.lane.b32.xlu0 %v73, 32
  %v494 = vpop.permute.xlu0 %493
  %v527 = vmul.f32 %v381, %v432
  %v528 = vmul.f32 %v386, %v434
  %v529 = vmul.f32 %v391, %v436
  %v530 = vmul.f32 %v396, %v438
  %v531 = vmul.f32 %v381, %v440
  %v532 = vmul.f32 %v386, %v442
  %v533 = vmul.f32 %v391, %v444
  %v534 = vmul.f32 %v396, %v446
  %v535 = vmul.f32 %v381, %v448
  %v536 = vmul.f32 %v386, %v450
  %v537 = vmul.f32 %v391, %v452
  %v538 = vmul.f32 %v396, %v454
  %v539 = vmul.f32 %v381, %v456
  %v540 = vmul.f32 %v386, %v458
  %v541 = vmul.f32 %v391, %v460
  %v542 = vmul.f32 %v396, %v462
  %v543 = vmul.f32 %v381, %v464
  %v544 = vmul.f32 %v386, %v466
  %v545 = vmul.f32 %v391, %v468
  %v546 = vmul.f32 %v396, %v470
  %v547 = vmul.f32 %v381, %v472
  %v548 = vmul.f32 %v386, %v474
  %v549 = vmul.f32 %v391, %v476
  %v550 = vmul.f32 %v396, %v478
  %v551 = vmul.f32 %v381, %v480
  %v552 = vmul.f32 %v386, %v482
  %v553 = vmul.f32 %v391, %v484
  %v554 = vmul.f32 %v396, %v486
  %v555 = vmul.f32 %v381, %v488
  %v556 = vmul.f32 %v386, %v490
  %v557 = vmul.f32 %v391, %v492
  %v558 = vmul.f32 %v396, %v494
  %559 = vrot.lane.b32.xlu0 %v42, 64
  %v560 = vpop.permute.xlu0 %559
  %561 = vrot.lane.b32.xlu0 %v43, 64
  %v562 = vpop.permute.xlu0 %561
  %563 = vrot.lane.b32.xlu0 %v44, 64
  %v564 = vpop.permute.xlu0 %563
  %565 = vrot.lane.b32.xlu0 %v45, 64
  %v566 = vpop.permute.xlu0 %565
  %567 = vrot.lane.b32.xlu0 %v46, 64
  %v568 = vpop.permute.xlu0 %567
  %569 = vrot.lane.b32.xlu0 %v47, 64
  %v570 = vpop.permute.xlu0 %569
  %571 = vrot.lane.b32.xlu0 %v48, 64
  %v572 = vpop.permute.xlu0 %571
  %573 = vrot.lane.b32.xlu0 %v49, 64
  %v574 = vpop.permute.xlu0 %573
  %575 = vrot.lane.b32.xlu0 %v50, 64
  %v576 = vpop.permute.xlu0 %575
  %577 = vrot.lane.b32.xlu0 %v51, 64
  %v578 = vpop.permute.xlu0 %577
  %579 = vrot.lane.b32.xlu0 %v52, 64
  %v580 = vpop.permute.xlu0 %579
  %581 = vrot.lane.b32.xlu0 %v53, 64
  %v582 = vpop.permute.xlu0 %581
  %583 = vrot.lane.b32.xlu0 %v54, 64
  %v584 = vpop.permute.xlu0 %583
  %585 = vrot.lane.b32.xlu0 %v55, 64
  %v586 = vpop.permute.xlu0 %585
  %587 = vrot.lane.b32.xlu0 %v56, 64
  %v588 = vpop.permute.xlu0 %587
  %589 = vrot.lane.b32.xlu0 %v57, 64
  %v590 = vpop.permute.xlu0 %589
  %591 = vrot.lane.b32.xlu0 %v58, 64
  %v592 = vpop.permute.xlu0 %591
  %593 = vrot.lane.b32.xlu0 %v59, 64
  %v594 = vpop.permute.xlu0 %593
  %595 = vrot.lane.b32.xlu0 %v60, 64
  %v596 = vpop.permute.xlu0 %595
  %597 = vrot.lane.b32.xlu0 %v61, 64
  %v598 = vpop.permute.xlu0 %597
  %599 = vrot.lane.b32.xlu0 %v62, 64
  %v600 = vpop.permute.xlu0 %599
  %601 = vrot.lane.b32.xlu0 %v63, 64
  %v602 = vpop.permute.xlu0 %601
  %603 = vrot.lane.b32.xlu0 %v64, 64
  %v604 = vpop.permute.xlu0 %603
  %605 = vrot.lane.b32.xlu0 %v65, 64
  %v606 = vpop.permute.xlu0 %605
  %607 = vrot.lane.b32.xlu0 %v66, 64
  %v608 = vpop.permute.xlu0 %607
  %609 = vrot.lane.b32.xlu0 %v67, 64
  %v610 = vpop.permute.xlu0 %609
  %611 = vrot.lane.b32.xlu0 %v68, 64
  %v612 = vpop.permute.xlu0 %611
  %613 = vrot.lane.b32.xlu0 %v69, 64
  %v614 = vpop.permute.xlu0 %613
  %615 = vrot.lane.b32.xlu0 %v70, 64
  %v616 = vpop.permute.xlu0 %615
  %617 = vrot.lane.b32.xlu0 %v71, 64
  %v618 = vpop.permute.xlu0 %617
  %619 = vrot.lane.b32.xlu0 %v72, 64
  %v620 = vpop.permute.xlu0 %619
  %621 = vrot.lane.b32.xlu0 %v73, 64
  %v622 = vpop.permute.xlu0 %621
  %v655 = vmul.f32 %v381, %v560
  %v656 = vmul.f32 %v386, %v562
  %v657 = vmul.f32 %v391, %v564
  %v658 = vmul.f32 %v396, %v566
  %v659 = vmul.f32 %v381, %v568
  %v660 = vmul.f32 %v386, %v570
  %v661 = vmul.f32 %v391, %v572
  %v662 = vmul.f32 %v396, %v574
  %v663 = vmul.f32 %v381, %v576
  %v664 = vmul.f32 %v386, %v578
  %v665 = vmul.f32 %v391, %v580
  %v666 = vmul.f32 %v396, %v582
  %v667 = vmul.f32 %v381, %v584
  %v668 = vmul.f32 %v386, %v586
  %v669 = vmul.f32 %v391, %v588
  %v670 = vmul.f32 %v396, %v590
  %v671 = vmul.f32 %v381, %v592
  %v672 = vmul.f32 %v386, %v594
  %v673 = vmul.f32 %v391, %v596
  %v674 = vmul.f32 %v396, %v598
  %v675 = vmul.f32 %v381, %v600
  %v676 = vmul.f32 %v386, %v602
  %v677 = vmul.f32 %v391, %v604
  %v678 = vmul.f32 %v396, %v606
  %v679 = vmul.f32 %v381, %v608
  %v680 = vmul.f32 %v386, %v610
  %v681 = vmul.f32 %v391, %v612
  %v682 = vmul.f32 %v396, %v614
  %v683 = vmul.f32 %v381, %v616
  %v684 = vmul.f32 %v386, %v618
  %v685 = vmul.f32 %v391, %v620
  %v686 = vmul.f32 %v396, %v622
  %719 = vrot.lane.b32.xlu0 %v527, 96
  %v720 = vpop.permute.xlu0 %719
  %721 = vrot.lane.b32.xlu0 %v528, 96
  %v722 = vpop.permute.xlu0 %721
  %723 = vrot.lane.b32.xlu0 %v529, 96
  %v724 = vpop.permute.xlu0 %723
  %725 = vrot.lane.b32.xlu0 %v530, 96
  %v726 = vpop.permute.xlu0 %725
  %727 = vrot.lane.b32.xlu0 %v531, 96
  %v728 = vpop.permute.xlu0 %727
  %729 = vrot.lane.b32.xlu0 %v532, 96
  %v730 = vpop.permute.xlu0 %729
  %731 = vrot.lane.b32.xlu0 %v533, 96
  %v732 = vpop.permute.xlu0 %731
  %733 = vrot.lane.b32.xlu0 %v534, 96
  %v734 = vpop.permute.xlu0 %733
  %735 = vrot.lane.b32.xlu0 %v535, 96
  %v736 = vpop.permute.xlu0 %735
  %737 = vrot.lane.b32.xlu0 %v536, 96
  %v738 = vpop.permute.xlu0 %737
  %739 = vrot.lane.b32.xlu0 %v537, 96
  %v740 = vpop.permute.xlu0 %739
  %741 = vrot.lane.b32.xlu0 %v538, 96
  %v742 = vpop.permute.xlu0 %741
  %743 = vrot.lane.b32.xlu0 %v539, 96
  %v744 = vpop.permute.xlu0 %743
  %745 = vrot.lane.b32.xlu0 %v540, 96
  %v746 = vpop.permute.xlu0 %745
  %747 = vrot.lane.b32.xlu0 %v541, 96
  %v748 = vpop.permute.xlu0 %747
  %749 = vrot.lane.b32.xlu0 %v542, 96
  %v750 = vpop.permute.xlu0 %749
  %751 = vrot.lane.b32.xlu0 %v543, 96
  %v752 = vpop.permute.xlu0 %751
  %753 = vrot.lane.b32.xlu0 %v544, 96
  %v754 = vpop.permute.xlu0 %753
  %755 = vrot.lane.b32.xlu0 %v545, 96
  %v756 = vpop.permute.xlu0 %755
  %757 = vrot.lane.b32.xlu0 %v546, 96
  %v758 = vpop.permute.xlu0 %757
  %759 = vrot.lane.b32.xlu0 %v547, 96
  %v760 = vpop.permute.xlu0 %759
  %761 = vrot.lane.b32.xlu0 %v548, 96
  %v762 = vpop.permute.xlu0 %761
  %763 = vrot.lane.b32.xlu0 %v549, 96
  %v764 = vpop.permute.xlu0 %763
  %765 = vrot.lane.b32.xlu0 %v550, 96
  %v766 = vpop.permute.xlu0 %765
  %767 = vrot.lane.b32.xlu0 %v551, 96
  %v768 = vpop.permute.xlu0 %767
  %769 = vrot.lane.b32.xlu0 %v552, 96
  %v770 = vpop.permute.xlu0 %769
  %771 = vrot.lane.b32.xlu0 %v553, 96
  %v772 = vpop.permute.xlu0 %771
  %773 = vrot.lane.b32.xlu0 %v554, 96
  %v774 = vpop.permute.xlu0 %773
  %775 = vrot.lane.b32.xlu0 %v555, 96
  %v776 = vpop.permute.xlu0 %775
  %777 = vrot.lane.b32.xlu0 %v556, 96
  %v778 = vpop.permute.xlu0 %777
  %779 = vrot.lane.b32.xlu0 %v557, 96
  %v780 = vpop.permute.xlu0 %779
  %781 = vrot.lane.b32.xlu0 %v558, 96
  %v782 = vpop.permute.xlu0 %781
  %v784 = vsel %vm124, %v381, 0
  %v787 = vsel %vm124, %v386, 0
  %v790 = vsel %vm124, %v391, 0
  %v793 = vsel %vm124, %v396, 0
  %v795 = vsel %vm124, %v720, 0
  %v797 = vsel %vm124, %v722, 0
  %v799 = vsel %vm124, %v724, 0
  %v801 = vsel %vm124, %v726, 0
  %v803 = vsel %vm124, %v728, 0
  %v805 = vsel %vm124, %v730, 0
  %v807 = vsel %vm124, %v732, 0
  %v809 = vsel %vm124, %v734, 0
  %v811 = vsel %vm124, %v736, 0
  %v813 = vsel %vm124, %v738, 0
  %v815 = vsel %vm124, %v740, 0
  %v817 = vsel %vm124, %v742, 0
  %v819 = vsel %vm124, %v744, 0
  %v821 = vsel %vm124, %v746, 0
  %v823 = vsel %vm124, %v748, 0
  %v825 = vsel %vm124, %v750, 0
  %v827 = vsel %vm124, %v752, 0
  %v829 = vsel %vm124, %v754, 0
  %v831 = vsel %vm124, %v756, 0
  %v833 = vsel %vm124, %v758, 0
  %v835 = vsel %vm124, %v760, 0
  %v837 = vsel %vm124, %v762, 0
  %v839 = vsel %vm124, %v764, 0
  %v841 = vsel %vm124, %v766, 0
  %v843 = vsel %vm124, %v768, 0
  %v845 = vsel %vm124, %v770, 0
  %v847 = vsel %vm124, %v772, 0
  %v849 = vsel %vm124, %v774, 0
  %v851 = vsel %vm124, %v776, 0
  %v853 = vsel %vm124, %v778, 0
  %v855 = vsel %vm124, %v780, 0
  %v857 = vsel %vm124, %v782, 0
  %859 = vmatprep.subr.mxu0 0.0
  %860 = vmatpush1.xpose.msra.mxu0 %v795
  %861 = vmatprep.subr.mxu0 0.0
  %862 = vmatpush1.xpose.msra.mxu0 %v797
  %863 = vmatprep.subr.mxu0 0.0
  %864 = vmatpush1.xpose.msra.mxu0 %v799
  %865 = vmatprep.subr.mxu0 0.0
  %866 = vmatpush1.xpose.msra.mxu0 %v801
  %867 = vmatprep.subr.mxu0 0.0
  %868 = vmatpush1.xpose.msra.mxu0 %v803
  %869 = vmatprep.subr.mxu0 0.0
  %870 = vmatpush1.xpose.msra.mxu0 %v805
  %871 = vmatprep.subr.mxu0 0.0
  %872 = vmatpush1.xpose.msra.mxu0 %v807
  %873 = vmatprep.subr.mxu0 0.0
  %874 = vmatpush1.xpose.msra.mxu0 %v809
  %875 = vmatprep.subr.mxu0 0.0
  %876 = vmatpush1.xpose.msra.mxu0 %v811
  %877 = vmatprep.subr.mxu0 0.0
  %878 = vmatpush1.xpose.msra.mxu0 %v813
  %879 = vmatprep.subr.mxu0 0.0
  %880 = vmatpush1.xpose.msra.mxu0 %v815
  %881 = vmatprep.subr.mxu0 0.0
  %882 = vmatpush1.xpose.msra.mxu0 %v817
  %883 = vmatprep.subr.mxu0 0.0
  %884 = vmatpush1.xpose.msra.mxu0 %v819
  %885 = vmatprep.subr.mxu0 0.0
  %886 = vmatpush1.xpose.msra.mxu0 %v821
  %887 = vmatprep.subr.mxu0 0.0
  %888 = vmatpush1.xpose.msra.mxu0 %v823
  %889 = vmatprep.subr.mxu0 0.0
  %890 = vmatpush1.xpose.msra.mxu0 %v825
  %891 = vmatprep.subr.mxu0 0.0
  %892 = vmatpush1.xpose.msra.mxu0 %v827
  %893 = vmatprep.subr.mxu0 0.0
  %894 = vmatpush1.xpose.msra.mxu0 %v829
  %895 = vmatprep.subr.mxu0 0.0
  %896 = vmatpush1.xpose.msra.mxu0 %v831
  %897 = vmatprep.subr.mxu0 0.0
  %898 = vmatpush1.xpose.msra.mxu0 %v833
  %899 = vmatprep.subr.mxu0 0.0
  %900 = vmatpush1.xpose.msra.mxu0 %v835
  %901 = vmatprep.subr.mxu0 0.0
  %902 = vmatpush1.xpose.msra.mxu0 %v837
  %903 = vmatprep.subr.mxu0 0.0
  %904 = vmatpush1.xpose.msra.mxu0 %v839
  %905 = vmatprep.subr.mxu0 0.0
  %906 = vmatpush1.xpose.msra.mxu0 %v841
  %907 = vmatprep.subr.mxu0 0.0
  %908 = vmatpush1.xpose.msra.mxu0 %v843
  %909 = vmatprep.subr.mxu0 0.0
  %910 = vmatpush1.xpose.msra.mxu0 %v845
  %911 = vmatprep.subr.mxu0 0.0
  %912 = vmatpush1.xpose.msra.mxu0 %v847
  %913 = vmatprep.subr.mxu0 0.0
  %914 = vmatpush1.xpose.msra.mxu0 %v849
  %915 = vmatprep.subr.mxu0 0.0
  %916 = vmatpush1.xpose.msra.mxu0 %v851
  %917 = vmatprep.subr.mxu0 0.0
  %918 = vmatpush1.xpose.msra.mxu0 %v853
  %919 = vmatprep.subr.mxu0 0.0
  %920 = vmatpush1.xpose.msra.mxu0 %v855
  %921 = vmatprep.subr.mxu0 0.0
  %922 = vmatpush1.xpose.msra.mxu0 %v857
  %923 = vmatprep.mubr.f32.mxu0 0.0
  %924 = vmatmul.mubr.f32.gmra.mrb[0].mxu0 %v784
  %v925 = vpop.f32.mrb[0].mxu0
  %v926 = vadd.f32 0.0, %v925
  %v927 = vpop.f32.mrb[0].mxu0
  %v928 = vadd.f32 0.0, %v927
  %929 = vmatprep.mubr.f32.mxu0 0.0
  %930 = vmatmul.mubr.f32.gmra.mrb[0].mxu0 %v787
  %v931 = vpop.f32.mrb[0].mxu0
  %v932 = vadd.f32 0.0, %v931
  %v933 = vpop.f32.mrb[0].mxu0
  %v934 = vadd.f32 0.0, %v933
  %935 = vmatprep.mubr.f32.mxu0 0.0
  %936 = vmatmul.mubr.f32.gmra.mrb[0].mxu0 %v790
  %v937 = vpop.f32.mrb[0].mxu0
  %v938 = vadd.f32 0.0, %v937
  %v939 = vpop.f32.mrb[0].mxu0
  %v940 = vadd.f32 0.0, %v939
  %941 = vmatprep.mubr.f32.mxu0 0.0
  %942 = vmatmul.mubr.f32.gmra.mrb[0].mxu0 %v793
  %v943 = vpop.f32.mrb[0].mxu0
  %v944 = vadd.f32 0.0, %v943
  %v945 = vpop.f32.mrb[0].mxu0
  %v946 = vadd.f32 0.0, %v945
  %947 = vdwg.mxu0
  %vm948 = vcmp.gt.f32.partialorder %v14, 0.5
  %vm949 = vcmp.gt.f32.partialorder %v15, 0.5
  %vm950 = vcmp.gt.f32.partialorder %v16, 0.5
  %vm951 = vcmp.gt.f32.partialorder %v17, 0.5
  %vm952 = vcmp.gt.f32.partialorder %v18, 0.5
  %vm953 = vcmp.gt.f32.partialorder %v19, 0.5
  %vm954 = vcmp.gt.f32.partialorder %v20, 0.5
  %vm955 = vcmp.gt.f32.partialorder %v21, 0.5
  %v956 = vsel %vm948, %v926, -1e+30
  %v957 = vsel %vm949, %v928, -1e+30
  %v958 = vsel %vm950, %v932, -1e+30
  %v959 = vsel %vm951, %v934, -1e+30
  %v960 = vsel %vm952, %v938, -1e+30
  %v961 = vsel %vm953, %v940, -1e+30
  %v962 = vsel %vm954, %v944, -1e+30
  %v963 = vsel %vm955, %v946, -1e+30
  %v964 = vmax.f32 %v956, %v957
  %965 = vmax.xlane.f32.xlu0 %v964
  %v966 = vpop.xlane.xlu0 %965
  %v967 = vmax.f32 %v958, %v959
  %968 = vmax.xlane.f32.xlu0 %v967
  %v969 = vpop.xlane.xlu0 %968
  %v970 = vmax.f32 %v960, %v961
  %971 = vmax.xlane.f32.xlu0 %v970
  %v972 = vpop.xlane.xlu0 %971
  %v973 = vmax.f32 %v962, %v963
  %974 = vmax.xlane.f32.xlu0 %v973
  %v975 = vpop.xlane.xlu0 %974
  %v976 = vsub.f32 %v956, %v966
  %v977 = vsub.f32 %v957, %v966
  %v978 = vsub.f32 %v958, %v969
  %v979 = vsub.f32 %v959, %v969
  %v980 = vsub.f32 %v960, %v972
  %v981 = vsub.f32 %v961, %v972
  %v982 = vsub.f32 %v962, %v975
  %v983 = vsub.f32 %v963, %v975
  %v984 = vmul.f32 %v976, 1.442695
  %v985 = vpow.pop %v984
  %v986 = vmul.f32 %v977, 1.442695
  %v987 = vpow.pop %v986
  %v988 = vmul.f32 %v978, 1.442695
  %v989 = vpow.pop %v988
  %v990 = vmul.f32 %v979, 1.442695
  %v991 = vpow.pop %v990
  %v992 = vmul.f32 %v980, 1.442695
  %v993 = vpow.pop %v992
  %v994 = vmul.f32 %v981, 1.442695
  %v995 = vpow.pop %v994
  %v996 = vmul.f32 %v982, 1.442695
  %v997 = vpow.pop %v996
  %v998 = vmul.f32 %v983, 1.442695
  %v999 = vpow.pop %v998
  %v1000 = vmul.f32 %v985, %v14
  %v1001 = vmul.f32 %v987, %v15
  %v1002 = vmul.f32 %v989, %v16
  %v1003 = vmul.f32 %v991, %v17
  %v1004 = vmul.f32 %v993, %v18
  %v1005 = vmul.f32 %v995, %v19
  %v1006 = vmul.f32 %v997, %v20
  %v1007 = vmul.f32 %v999, %v21
  %1040 = vrot.lane.b32.xlu0 %v655, 64
  %v1041 = vpop.permute.xlu0 %1040
  %1042 = vrot.lane.b32.xlu0 %v656, 64
  %v1043 = vpop.permute.xlu0 %1042
  %1044 = vrot.lane.b32.xlu0 %v657, 64
  %v1045 = vpop.permute.xlu0 %1044
  %1046 = vrot.lane.b32.xlu0 %v658, 64
  %v1047 = vpop.permute.xlu0 %1046
  %1048 = vrot.lane.b32.xlu0 %v659, 64
  %v1049 = vpop.permute.xlu0 %1048
  %1050 = vrot.lane.b32.xlu0 %v660, 64
  %v1051 = vpop.permute.xlu0 %1050
  %1052 = vrot.lane.b32.xlu0 %v661, 64
  %v1053 = vpop.permute.xlu0 %1052
  %1054 = vrot.lane.b32.xlu0 %v662, 64
  %v1055 = vpop.permute.xlu0 %1054
  %1056 = vrot.lane.b32.xlu0 %v663, 64
  %v1057 = vpop.permute.xlu0 %1056
  %1058 = vrot.lane.b32.xlu0 %v664, 64
  %v1059 = vpop.permute.xlu0 %1058
  %1060 = vrot.lane.b32.xlu0 %v665, 64
  %v1061 = vpop.permute.xlu0 %1060
  %1062 = vrot.lane.b32.xlu0 %v666, 64
  %v1063 = vpop.permute.xlu0 %1062
  %1064 = vrot.lane.b32.xlu0 %v667, 64
  %v1065 = vpop.permute.xlu0 %1064
  %1066 = vrot.lane.b32.xlu0 %v668, 64
  %v1067 = vpop.permute.xlu0 %1066
  %1068 = vrot.lane.b32.xlu0 %v669, 64
  %v1069 = vpop.permute.xlu0 %1068
  %1070 = vrot.lane.b32.xlu0 %v670, 64
  %v1071 = vpop.permute.xlu0 %1070
  %1072 = vrot.lane.b32.xlu0 %v671, 64
  %v1073 = vpop.permute.xlu0 %1072
  %1074 = vrot.lane.b32.xlu0 %v672, 64
  %v1075 = vpop.permute.xlu0 %1074
  %1076 = vrot.lane.b32.xlu0 %v673, 64
  %v1077 = vpop.permute.xlu0 %1076
  %1078 = vrot.lane.b32.xlu0 %v674, 64
  %v1079 = vpop.permute.xlu0 %1078
  %1080 = vrot.lane.b32.xlu0 %v675, 64
  %v1081 = vpop.permute.xlu0 %1080
  %1082 = vrot.lane.b32.xlu0 %v676, 64
  %v1083 = vpop.permute.xlu0 %1082
  %1084 = vrot.lane.b32.xlu0 %v677, 64
  %v1085 = vpop.permute.xlu0 %1084
  %1086 = vrot.lane.b32.xlu0 %v678, 64
  %v1087 = vpop.permute.xlu0 %1086
  %1088 = vrot.lane.b32.xlu0 %v679, 64
  %v1089 = vpop.permute.xlu0 %1088
  %1090 = vrot.lane.b32.xlu0 %v680, 64
  %v1091 = vpop.permute.xlu0 %1090
  %1092 = vrot.lane.b32.xlu0 %v681, 64
  %v1093 = vpop.permute.xlu0 %1092
  %1094 = vrot.lane.b32.xlu0 %v682, 64
  %v1095 = vpop.permute.xlu0 %1094
  %1096 = vrot.lane.b32.xlu0 %v683, 64
  %v1097 = vpop.permute.xlu0 %1096
  %1098 = vrot.lane.b32.xlu0 %v684, 64
  %v1099 = vpop.permute.xlu0 %1098
  %1100 = vrot.lane.b32.xlu0 %v685, 64
  %v1101 = vpop.permute.xlu0 %1100
  %1102 = vrot.lane.b32.xlu0 %v686, 64
  %v1103 = vpop.permute.xlu0 %1102
  %1136 = vmatprep.subr.mxu0 0.0
  %1137 = vmatpush1.msra.mxu0 %v1041
  %1138 = vmatprep.subr.mxu0 0.0
  %1139 = vmatpush1.msra.mxu0 %v1043
  %1140 = vmatprep.subr.mxu0 0.0
  %1141 = vmatpush1.msra.mxu0 %v1045
  %1142 = vmatprep.subr.mxu0 0.0
  %1143 = vmatpush1.msra.mxu0 %v1047
  %1144 = vmatprep.subr.mxu0 0.0
  %1145 = vmatpush1.msra.mxu0 %v1049
  %1146 = vmatprep.subr.mxu0 0.0
  %1147 = vmatpush1.msra.mxu0 %v1051
  %1148 = vmatprep.subr.mxu0 0.0
  %1149 = vmatpush1.msra.mxu0 %v1053
  %1150 = vmatprep.subr.mxu0 0.0
  %1151 = vmatpush1.msra.mxu0 %v1055
  %1152 = vmatprep.subr.mxu0 0.0
  %1153 = vmatpush1.msra.mxu0 %v1057
  %1154 = vmatprep.subr.mxu0 0.0
  %1155 = vmatpush1.msra.mxu0 %v1059
  %1156 = vmatprep.subr.mxu0 0.0
  %1157 = vmatpush1.msra.mxu0 %v1061
  %1158 = vmatprep.subr.mxu0 0.0
  %1159 = vmatpush1.msra.mxu0 %v1063
  %1160 = vmatprep.subr.mxu0 0.0
  %1161 = vmatpush1.msra.mxu0 %v1065
  %1162 = vmatprep.subr.mxu0 0.0
  %1163 = vmatpush1.msra.mxu0 %v1067
  %1164 = vmatprep.subr.mxu0 0.0
  %1165 = vmatpush1.msra.mxu0 %v1069
  %1166 = vmatprep.subr.mxu0 0.0
  %1167 = vmatpush1.msra.mxu0 %v1071
  %1168 = vmatprep.subr.mxu0 0.0
  %1169 = vmatpush1.msra.mxu0 %v1073
  %1170 = vmatprep.subr.mxu0 0.0
  %1171 = vmatpush1.msra.mxu0 %v1075
  %1172 = vmatprep.subr.mxu0 0.0
  %1173 = vmatpush1.msra.mxu0 %v1077
  %1174 = vmatprep.subr.mxu0 0.0
  %1175 = vmatpush1.msra.mxu0 %v1079
  %1176 = vmatprep.subr.mxu0 0.0
  %1177 = vmatpush1.msra.mxu0 %v1081
  %1178 = vmatprep.subr.mxu0 0.0
  %1179 = vmatpush1.msra.mxu0 %v1083
  %1180 = vmatprep.subr.mxu0 0.0
  %1181 = vmatpush1.msra.mxu0 %v1085
  %1182 = vmatprep.subr.mxu0 0.0
  %1183 = vmatpush1.msra.mxu0 %v1087
  %1184 = vmatprep.subr.mxu0 0.0
  %1185 = vmatpush1.msra.mxu0 %v1089
  %1186 = vmatprep.subr.mxu0 0.0
  %1187 = vmatpush1.msra.mxu0 %v1091
  %1188 = vmatprep.subr.mxu0 0.0
  %1189 = vmatpush1.msra.mxu0 %v1093
  %1190 = vmatprep.subr.mxu0 0.0
  %1191 = vmatpush1.msra.mxu0 %v1095
  %1192 = vmatprep.subr.mxu0 0.0
  %1193 = vmatpush1.msra.mxu0 %v1097
  %1194 = vmatprep.subr.mxu0 0.0
  %1195 = vmatpush1.msra.mxu0 %v1099
  %1196 = vmatprep.subr.mxu0 0.0
  %1197 = vmatpush1.msra.mxu0 %v1101
  %1198 = vmatprep.subr.mxu0 0.0
  %1199 = vmatpush1.msra.mxu0 %v1103
  %1200 = vmatprep.mubr.f32.mxu0 %v1001
  %1201 = vmatmul.mubr.f32.gmra.mrb[0].mxu0 %v1000
  %v1202 = vpop.f32.mrb[0].mxu0
  %v1203 = vadd.f32 0.0, %v1202
  %v1204 = vpop.f32.mrb[0].mxu0
  %1205 = vmatprep.mubr.f32.mxu0 %v1003
  %1206 = vmatmul.mubr.f32.gmra.mrb[0].mxu0 %v1002
  %v1207 = vpop.f32.mrb[0].mxu0
  %v1208 = vadd.f32 0.0, %v1207
  %v1209 = vpop.f32.mrb[0].mxu0
  %1210 = vmatprep.mubr.f32.mxu0 %v1005
  %1211 = vmatmul.mubr.f32.gmra.mrb[0].mxu0 %v1004
  %v1212 = vpop.f32.mrb[0].mxu0
  %v1213 = vadd.f32 0.0, %v1212
  %v1214 = vpop.f32.mrb[0].mxu0
  %1215 = vmatprep.mubr.f32.mxu0 %v1007
  %1216 = vmatmul.mubr.f32.gmra.mrb[0].mxu0 %v1006
  %v1217 = vpop.f32.mrb[0].mxu0
  %v1218 = vadd.f32 0.0, %v1217
  %v1219 = vpop.f32.mrb[0].mxu0
  %1220 = vdwg.mxu0
  %1221 = vmatprep.subr.mxu0 0.0
  %1222 = vmatpush1.msra.mxu0 %v42
  %1223 = vmatprep.subr.mxu0 0.0
  %1224 = vmatpush1.msra.mxu0 %v43
  %1225 = vmatprep.subr.mxu0 0.0
  %1226 = vmatpush1.msra.mxu0 %v44
  %1227 = vmatprep.subr.mxu0 0.0
  %1228 = vmatpush1.msra.mxu0 %v45
  %1229 = vmatprep.subr.mxu0 0.0
  %1230 = vmatpush1.msra.mxu0 %v46
  %1231 = vmatprep.subr.mxu0 0.0
  %1232 = vmatpush1.msra.mxu0 %v47
  %1233 = vmatprep.subr.mxu0 0.0
  %1234 = vmatpush1.msra.mxu0 %v48
  %1235 = vmatprep.subr.mxu0 0.0
  %1236 = vmatpush1.msra.mxu0 %v49
  %1237 = vmatprep.subr.mxu0 0.0
  %1238 = vmatpush1.msra.mxu0 %v50
  %1239 = vmatprep.subr.mxu0 0.0
  %1240 = vmatpush1.msra.mxu0 %v51
  %1241 = vmatprep.subr.mxu0 0.0
  %1242 = vmatpush1.msra.mxu0 %v52
  %1243 = vmatprep.subr.mxu0 0.0
  %1244 = vmatpush1.msra.mxu0 %v53
  %1245 = vmatprep.subr.mxu0 0.0
  %1246 = vmatpush1.msra.mxu0 %v54
  %1247 = vmatprep.subr.mxu0 0.0
  %1248 = vmatpush1.msra.mxu0 %v55
  %1249 = vmatprep.subr.mxu0 0.0
  %1250 = vmatpush1.msra.mxu0 %v56
  %1251 = vmatprep.subr.mxu0 0.0
  %1252 = vmatpush1.msra.mxu0 %v57
  %1253 = vmatprep.subr.mxu0 0.0
  %1254 = vmatpush1.msra.mxu0 %v58
  %1255 = vmatprep.subr.mxu0 0.0
  %1256 = vmatpush1.msra.mxu0 %v59
  %1257 = vmatprep.subr.mxu0 0.0
  %1258 = vmatpush1.msra.mxu0 %v60
  %1259 = vmatprep.subr.mxu0 0.0
  %1260 = vmatpush1.msra.mxu0 %v61
  %1261 = vmatprep.subr.mxu0 0.0
  %1262 = vmatpush1.msra.mxu0 %v62
  %1263 = vmatprep.subr.mxu0 0.0
  %1264 = vmatpush1.msra.mxu0 %v63
  %1265 = vmatprep.subr.mxu0 0.0
  %1266 = vmatpush1.msra.mxu0 %v64
  %1267 = vmatprep.subr.mxu0 0.0
  %1268 = vmatpush1.msra.mxu0 %v65
  %1269 = vmatprep.subr.mxu0 0.0
  %1270 = vmatpush1.msra.mxu0 %v66
  %1271 = vmatprep.subr.mxu0 0.0
  %1272 = vmatpush1.msra.mxu0 %v67
  %1273 = vmatprep.subr.mxu0 0.0
  %1274 = vmatpush1.msra.mxu0 %v68
  %1275 = vmatprep.subr.mxu0 0.0
  %1276 = vmatpush1.msra.mxu0 %v69
  %1277 = vmatprep.subr.mxu0 0.0
  %1278 = vmatpush1.msra.mxu0 %v70
  %1279 = vmatprep.subr.mxu0 0.0
  %1280 = vmatpush1.msra.mxu0 %v71
  %1281 = vmatprep.subr.mxu0 0.0
  %1282 = vmatpush1.msra.mxu0 %v72
  %1283 = vmatprep.subr.mxu0 0.0
  %1284 = vmatpush1.msra.mxu0 %v73
  %1285 = vmatprep.mubr.f32.mxu0 %v1001
  %1286 = vmatmul.mubr.f32.gmra.mrb[0].mxu0 %v1000
  %v1287 = vpop.f32.mrb[0].mxu0
  %v1288 = vadd.f32 0.0, %v1287
  %v1289 = vpop.f32.mrb[0].mxu0
  %1290 = vmatprep.mubr.f32.mxu0 %v1003
  %1291 = vmatmul.mubr.f32.gmra.mrb[0].mxu0 %v1002
  %v1292 = vpop.f32.mrb[0].mxu0
  %v1293 = vadd.f32 0.0, %v1292
  %v1294 = vpop.f32.mrb[0].mxu0
  %1295 = vmatprep.mubr.f32.mxu0 %v1005
  %1296 = vmatmul.mubr.f32.gmra.mrb[0].mxu0 %v1004
  %v1297 = vpop.f32.mrb[0].mxu0
  %v1298 = vadd.f32 0.0, %v1297
  %v1299 = vpop.f32.mrb[0].mxu0
  %1300 = vmatprep.mubr.f32.mxu0 %v1007
  %1301 = vmatmul.mubr.f32.gmra.mrb[0].mxu0 %v1006
  %v1302 = vpop.f32.mrb[0].mxu0
  %v1303 = vadd.f32 0.0, %v1302
  %v1304 = vpop.f32.mrb[0].mxu0
  %1305 = vdwg.mxu0
  %v1306 = vrcp.pop %v1288
  %v1307 = vmul.f32 %v1203, %v1306
  %v1308 = vrcp.pop %v1293
  %v1309 = vmul.f32 %v1208, %v1308
  %v1310 = vrcp.pop %v1298
  %v1311 = vmul.f32 %v1213, %v1310
  %v1312 = vrcp.pop %v1303
  %v1313 = vmul.f32 %v1218, %v1312
  %1318 = vrot.lane.b32.xlu0 %v22, 32
  %v1319 = vpop.permute.xlu0 %1318
  %1320 = vrot.lane.b32.xlu0 %v23, 32
  %v1321 = vpop.permute.xlu0 %1320
  %1322 = vrot.lane.b32.xlu0 %v24, 32
  %v1323 = vpop.permute.xlu0 %1322
  %1324 = vrot.lane.b32.xlu0 %v25, 32
  %v1325 = vpop.permute.xlu0 %1324
  %v1331 = vsel %vm124, %v1307, 0
  %v1334 = vsel %vm124, %v1309, 0
  %v1337 = vsel %vm124, %v1311, 0
  %v1340 = vsel %vm124, %v1313, 0
  %1342 = vmatprep.subr.mxu0 0.0
  %1343 = vmatpush1.msra.mxu0 %v1319
  %1344 = vmatprep.subr.mxu0 0.0
  %1345 = vmatpush1.msra.mxu0 %v1321
  %1346 = vmatprep.subr.mxu0 0.0
  %1347 = vmatpush1.msra.mxu0 %v1323
  %1348 = vmatprep.subr.mxu0 0.0
  %1349 = vmatpush1.msra.mxu0 %v1325
  %1350 = vmatprep.subr.mxu0 0.0
  %1351 = vmatpush1.msra.mxu0 0.0
  %1352 = vmatprep.subr.mxu0 0.0
  %1353 = vmatpush1.msra.mxu0 0.0
  %1354 = vmatprep.subr.mxu0 0.0
  %1355 = vmatpush1.msra.mxu0 0.0
  %1356 = vmatprep.subr.mxu0 0.0
  %1357 = vmatpush1.msra.mxu0 0.0
  %1358 = vmatprep.subr.mxu0 0.0
  %1359 = vmatpush1.msra.mxu0 0.0
  %1360 = vmatprep.subr.mxu0 0.0
  %1361 = vmatpush1.msra.mxu0 0.0
  %1362 = vmatprep.subr.mxu0 0.0
  %1363 = vmatpush1.msra.mxu0 0.0
  %1364 = vmatprep.subr.mxu0 0.0
  %1365 = vmatpush1.msra.mxu0 0.0
  %1366 = vmatprep.subr.mxu0 0.0
  %1367 = vmatpush1.msra.mxu0 0.0
  %1368 = vmatprep.subr.mxu0 0.0
  %1369 = vmatpush1.msra.mxu0 0.0
  %1370 = vmatprep.subr.mxu0 0.0
  %1371 = vmatpush1.msra.mxu0 0.0
  %1372 = vmatprep.subr.mxu0 0.0
  %1373 = vmatpush1.msra.mxu0 0.0
  %1374 = vmatprep.subr.mxu0 0.0
  %1375 = vmatpush1.msra.mxu0 0.0
  %1376 = vmatprep.subr.mxu0 0.0
  %1377 = vmatpush1.msra.mxu0 0.0
  %1378 = vmatprep.subr.mxu0 0.0
  %1379 = vmatpush1.msra.mxu0 0.0
  %1380 = vmatprep.subr.mxu0 0.0
  %1381 = vmatpush1.msra.mxu0 0.0
  %1382 = vmatprep.subr.mxu0 0.0
  %1383 = vmatpush1.msra.mxu0 0.0
  %1384 = vmatprep.subr.mxu0 0.0
  %1385 = vmatpush1.msra.mxu0 0.0
  %1386 = vmatprep.subr.mxu0 0.0
  %1387 = vmatpush1.msra.mxu0 0.0
  %1388 = vmatprep.subr.mxu0 0.0
  %1389 = vmatpush1.msra.mxu0 0.0
  %1390 = vmatprep.subr.mxu0 0.0
  %1391 = vmatpush1.msra.mxu0 0.0
  %1392 = vmatprep.subr.mxu0 0.0
  %1393 = vmatpush1.msra.mxu0 0.0
  %1394 = vmatprep.subr.mxu0 0.0
  %1395 = vmatpush1.msra.mxu0 0.0
  %1396 = vmatprep.subr.mxu0 0.0
  %1397 = vmatpush1.msra.mxu0 0.0
  %1398 = vmatprep.subr.mxu0 0.0
  %1399 = vmatpush1.msra.mxu0 0.0
  %1400 = vmatprep.subr.mxu0 0.0
  %1401 = vmatpush1.msra.mxu0 0.0
  %1402 = vmatprep.subr.mxu0 0.0
  %1403 = vmatpush1.msra.mxu0 0.0
  %1404 = vmatprep.subr.mxu0 0.0
  %1405 = vmatpush1.msra.mxu0 0.0
  %1406 = vmatprep.mubr.f32.mxu0 0.0
  %1407 = vmatmul.mubr.f32.gmra.mrb[0].mxu0 %v1331
  %v1408 = vpop.f32.mrb[0].mxu0
  %v1409 = vadd.f32 0.0, %v1408
  %v1410 = vpop.f32.mrb[0].mxu0
  %1411 = vmatprep.mubr.f32.mxu0 0.0
  %1412 = vmatmul.mubr.f32.gmra.mrb[0].mxu0 %v1334
  %v1413 = vpop.f32.mrb[0].mxu0
  %v1414 = vadd.f32 0.0, %v1413
  %v1415 = vpop.f32.mrb[0].mxu0
  %1416 = vmatprep.mubr.f32.mxu0 0.0
  %1417 = vmatmul.mubr.f32.gmra.mrb[0].mxu0 %v1337
  %v1418 = vpop.f32.mrb[0].mxu0
  %v1419 = vadd.f32 0.0, %v1418
  %v1420 = vpop.f32.mrb[0].mxu0
  %1421 = vmatprep.mubr.f32.mxu0 0.0
  %1422 = vmatmul.mubr.f32.gmra.mrb[0].mxu0 %v1340
  %v1423 = vpop.f32.mrb[0].mxu0
  %v1424 = vadd.f32 0.0, %v1423
  %v1425 = vpop.f32.mrb[0].mxu0
  %1426 = vdwg.mxu0
  %v1427 = vadd.f32 %v216, %v1409
  %v1428 = vadd.f32 %v221, %v1414
  %v1429 = vadd.f32 %v226, %v1419
  %v1430 = vadd.f32 %v231, %v1424
  %v1431 = vadd.f32 %v1427, %v40
  %v1432 = vadd.f32 %v1428, %v40
  %v1433 = vadd.f32 %v1429, %v40
  %v1434 = vadd.f32 %v1430, %v40
  %v1435 = vsel %vm124, %v1431, 0.0
  %1436 = vadd.xlane.f32.xlu0 %v1435
  %v1437 = vpop.xlane.xlu0 %1436
  %v1438 = vsel %vm124, %v1432, 0.0
  %1439 = vadd.xlane.f32.xlu0 %v1438
  %v1440 = vpop.xlane.xlu0 %1439
  %v1441 = vsel %vm124, %v1433, 0.0
  %1442 = vadd.xlane.f32.xlu0 %v1441
  %v1443 = vpop.xlane.xlu0 %1442
  %v1444 = vsel %vm124, %v1434, 0.0
  %1445 = vadd.xlane.f32.xlu0 %v1444
  %v1446 = vpop.xlane.xlu0 %1445
  %v1447 = vmul.f32 %v1437, %v246
  %v1448 = vmul.f32 %v1440, %v246
  %v1449 = vmul.f32 %v1443, %v246
  %v1450 = vmul.f32 %v1446, %v246
  %v1451 = vsub.f32 %v1431, %v1447
  %v1452 = vsub.f32 %v1432, %v1448
  %v1453 = vsub.f32 %v1433, %v1449
  %v1454 = vsub.f32 %v1434, %v1450
  %v1455 = vmul.f32 %v1451, %v1451
  %v1456 = vmul.f32 %v1452, %v1452
  %v1457 = vmul.f32 %v1453, %v1453
  %v1458 = vmul.f32 %v1454, %v1454
  %v1459 = vsel %vm124, %v1455, 0.0
  %1460 = vadd.xlane.f32.xlu0 %v1459
  %v1461 = vpop.xlane.xlu0 %1460
  %v1462 = vsel %vm124, %v1456, 0.0
  %1463 = vadd.xlane.f32.xlu0 %v1462
  %v1464 = vpop.xlane.xlu0 %1463
  %v1465 = vsel %vm124, %v1457, 0.0
  %1466 = vadd.xlane.f32.xlu0 %v1465
  %v1467 = vpop.xlane.xlu0 %1466
  %v1468 = vsel %vm124, %v1458, 0.0
  %1469 = vadd.xlane.f32.xlu0 %v1468
  %v1470 = vpop.xlane.xlu0 %1469
  %v1471 = vmul.f32 %v1461, %v246
  %v1472 = vmul.f32 %v1464, %v246
  %v1473 = vmul.f32 %v1467, %v246
  %v1474 = vmul.f32 %v1470, %v246
  %v1475 = vadd.f32 %v1471, 1e-05
  %v1476 = vadd.f32 %v1472, 1e-05
  %v1477 = vadd.f32 %v1473, 1e-05
  %v1478 = vadd.f32 %v1474, 1e-05
  %v1479 = vrsqrt.pop %v1475
  %v1480 = vrsqrt.pop %v1476
  %v1481 = vrsqrt.pop %v1477
  %v1482 = vrsqrt.pop %v1478
  %v1483 = vmul.f32 %v1451, %v1479
  %v1484 = vmul.f32 %v1452, %v1480
  %v1485 = vmul.f32 %v1453, %v1481
  %v1486 = vmul.f32 %v1454, %v1482
  %v1487 = vmul.f32 %v1483, %v41
  %v1488 = vmul.f32 %v1484, %v41
  %v1489 = vmul.f32 %v1485, %v41
  %v1490 = vmul.f32 %v1486, %v41
  %1492 = vrot.lane.b32.xlu0 %v41, 96
  %v1493 = vpop.permute.xlu0 %1492
  %v1495 = vadd.f32 %v1487, %v1493
  %v1496 = vadd.f32 %v1488, %v1493
  %v1497 = vadd.f32 %v1489, %v1493
  %v1498 = vadd.f32 %v1490, %v1493
  %v1500 = vsel %vm124, %v1495, 0
  %v1503 = vsel %vm124, %v1496, 0
  %v1506 = vsel %vm124, %v1497, 0
  %v1509 = vsel %vm124, %v1498, 0
  %1511 = vmatprep.subr.mxu0 0.0
  %1512 = vmatpush1.msra.mxu0 %v26
  %1513 = vmatprep.subr.mxu0 0.0
  %1514 = vmatpush1.msra.mxu0 %v27
  %1515 = vmatprep.subr.mxu0 0.0
  %1516 = vmatpush1.msra.mxu0 %v28
  %1517 = vmatprep.subr.mxu0 0.0
  %1518 = vmatpush1.msra.mxu0 %v29
  %1519 = vmatprep.subr.mxu0 0.0
  %1520 = vmatpush1.msra.mxu0 0.0
  %1521 = vmatprep.subr.mxu0 0.0
  %1522 = vmatpush1.msra.mxu0 0.0
  %1523 = vmatprep.subr.mxu0 0.0
  %1524 = vmatpush1.msra.mxu0 0.0
  %1525 = vmatprep.subr.mxu0 0.0
  %1526 = vmatpush1.msra.mxu0 0.0
  %1527 = vmatprep.subr.mxu0 0.0
  %1528 = vmatpush1.msra.mxu0 0.0
  %1529 = vmatprep.subr.mxu0 0.0
  %1530 = vmatpush1.msra.mxu0 0.0
  %1531 = vmatprep.subr.mxu0 0.0
  %1532 = vmatpush1.msra.mxu0 0.0
  %1533 = vmatprep.subr.mxu0 0.0
  %1534 = vmatpush1.msra.mxu0 0.0
  %1535 = vmatprep.subr.mxu0 0.0
  %1536 = vmatpush1.msra.mxu0 0.0
  %1537 = vmatprep.subr.mxu0 0.0
  %1538 = vmatpush1.msra.mxu0 0.0
  %1539 = vmatprep.subr.mxu0 0.0
  %1540 = vmatpush1.msra.mxu0 0.0
  %1541 = vmatprep.subr.mxu0 0.0
  %1542 = vmatpush1.msra.mxu0 0.0
  %1543 = vmatprep.subr.mxu0 0.0
  %1544 = vmatpush1.msra.mxu0 0.0
  %1545 = vmatprep.subr.mxu0 0.0
  %1546 = vmatpush1.msra.mxu0 0.0
  %1547 = vmatprep.subr.mxu0 0.0
  %1548 = vmatpush1.msra.mxu0 0.0
  %1549 = vmatprep.subr.mxu0 0.0
  %1550 = vmatpush1.msra.mxu0 0.0
  %1551 = vmatprep.subr.mxu0 0.0
  %1552 = vmatpush1.msra.mxu0 0.0
  %1553 = vmatprep.subr.mxu0 0.0
  %1554 = vmatpush1.msra.mxu0 0.0
  %1555 = vmatprep.subr.mxu0 0.0
  %1556 = vmatpush1.msra.mxu0 0.0
  %1557 = vmatprep.subr.mxu0 0.0
  %1558 = vmatpush1.msra.mxu0 0.0
  %1559 = vmatprep.subr.mxu0 0.0
  %1560 = vmatpush1.msra.mxu0 0.0
  %1561 = vmatprep.subr.mxu0 0.0
  %1562 = vmatpush1.msra.mxu0 0.0
  %1563 = vmatprep.subr.mxu0 0.0
  %1564 = vmatpush1.msra.mxu0 0.0
  %1565 = vmatprep.subr.mxu0 0.0
  %1566 = vmatpush1.msra.mxu0 0.0
  %1567 = vmatprep.subr.mxu0 0.0
  %1568 = vmatpush1.msra.mxu0 0.0
  %1569 = vmatprep.subr.mxu0 0.0
  %1570 = vmatpush1.msra.mxu0 0.0
  %1571 = vmatprep.subr.mxu0 0.0
  %1572 = vmatpush1.msra.mxu0 0.0
  %1573 = vmatprep.subr.mxu0 0.0
  %1574 = vmatpush1.msra.mxu0 0.0
  %1575 = vmatprep.mubr.f32.mxu0 0.0
  %1576 = vmatmul.mubr.f32.gmra.mrb[0].mxu0 %v1500
  %v1577 = vpop.f32.mrb[0].mxu0
  %v1578 = vadd.f32 %v39, %v1577
  %v1579 = vpop.f32.mrb[0].mxu0
  %1580 = vmatprep.mubr.f32.mxu0 0.0
  %1581 = vmatmul.mubr.f32.gmra.mrb[0].mxu0 %v1503
  %v1582 = vpop.f32.mrb[0].mxu0
  %v1583 = vadd.f32 %v39, %v1582
  %v1584 = vpop.f32.mrb[0].mxu0
  %1585 = vmatprep.mubr.f32.mxu0 0.0
  %1586 = vmatmul.mubr.f32.gmra.mrb[0].mxu0 %v1506
  %v1587 = vpop.f32.mrb[0].mxu0
  %v1588 = vadd.f32 %v39, %v1587
  %v1589 = vpop.f32.mrb[0].mxu0
  %1590 = vmatprep.mubr.f32.mxu0 0.0
  %1591 = vmatmul.mubr.f32.gmra.mrb[0].mxu0 %v1509
  %v1592 = vpop.f32.mrb[0].mxu0
  %v1593 = vadd.f32 %v39, %v1592
  %v1594 = vpop.f32.mrb[0].mxu0
  %1595 = vdwg.mxu0
  %v1596 = vmax.f32 %v1578, 0.0
  %v1597 = vmax.f32 %v1583, 0.0
  %v1598 = vmax.f32 %v1588, 0.0
  %v1599 = vmax.f32 %v1593, 0.0
  %1604 = vrot.lane.b32.xlu0 %v26, 64
  %v1605 = vpop.permute.xlu0 %1604
  %1606 = vrot.lane.b32.xlu0 %v27, 64
  %v1607 = vpop.permute.xlu0 %1606
  %1608 = vrot.lane.b32.xlu0 %v28, 64
  %v1609 = vpop.permute.xlu0 %1608
  %1610 = vrot.lane.b32.xlu0 %v29, 64
  %v1611 = vpop.permute.xlu0 %1610
  %vm1612 = vcmask 523264
  %v1614 = vsel %vm1612, %v1596, 0
  %v1617 = vsel %vm1612, %v1597, 0
  %v1620 = vsel %vm1612, %v1598, 0
  %v1623 = vsel %vm1612, %v1599, 0
  %v1625 = vsel %vm1612, %v1605, 0
  %v1627 = vsel %vm1612, %v1607, 0
  %v1629 = vsel %vm1612, %v1609, 0
  %v1631 = vsel %vm1612, %v1611, 0
  %1633 = vmatprep.subr.mxu0 0.0
  %1634 = vmatpush1.xpose.msra.mxu0 %v1625
  %1635 = vmatprep.subr.mxu0 0.0
  %1636 = vmatpush1.xpose.msra.mxu0 %v1627
  %1637 = vmatprep.subr.mxu0 0.0
  %1638 = vmatpush1.xpose.msra.mxu0 %v1629
  %1639 = vmatprep.subr.mxu0 0.0
  %1640 = vmatpush1.xpose.msra.mxu0 %v1631
  %1641 = vmatprep.subr.mxu0 0.0
  %1642 = vmatpush1.xpose.msra.mxu0 0.0
  %1643 = vmatprep.subr.mxu0 0.0
  %1644 = vmatpush1.xpose.msra.mxu0 0.0
  %1645 = vmatprep.subr.mxu0 0.0
  %1646 = vmatpush1.xpose.msra.mxu0 0.0
  %1647 = vmatprep.subr.mxu0 0.0
  %1648 = vmatpush1.xpose.msra.mxu0 0.0
  %1649 = vmatprep.subr.mxu0 0.0
  %1650 = vmatpush1.xpose.msra.mxu0 0.0
  %1651 = vmatprep.subr.mxu0 0.0
  %1652 = vmatpush1.xpose.msra.mxu0 0.0
  %1653 = vmatprep.subr.mxu0 0.0
  %1654 = vmatpush1.xpose.msra.mxu0 0.0
  %1655 = vmatprep.subr.mxu0 0.0
  %1656 = vmatpush1.xpose.msra.mxu0 0.0
  %1657 = vmatprep.subr.mxu0 0.0
  %1658 = vmatpush1.xpose.msra.mxu0 0.0
  %1659 = vmatprep.subr.mxu0 0.0
  %1660 = vmatpush1.xpose.msra.mxu0 0.0
  %1661 = vmatprep.subr.mxu0 0.0
  %1662 = vmatpush1.xpose.msra.mxu0 0.0
  %1663 = vmatprep.subr.mxu0 0.0
  %1664 = vmatpush1.xpose.msra.mxu0 0.0
  %1665 = vmatprep.subr.mxu0 0.0
  %1666 = vmatpush1.xpose.msra.mxu0 0.0
  %1667 = vmatprep.subr.mxu0 0.0
  %1668 = vmatpush1.xpose.msra.mxu0 0.0
  %1669 = vmatprep.subr.mxu0 0.0
  %1670 = vmatpush1.xpose.msra.mxu0 0.0
  %1671 = vmatprep.subr.mxu0 0.0
  %1672 = vmatpush1.xpose.msra.mxu0 0.0
  %1673 = vmatprep.subr.mxu0 0.0
  %1674 = vmatpush1.xpose.msra.mxu0 0.0
  %1675 = vmatprep.subr.mxu0 0.0
  %1676 = vmatpush1.xpose.msra.mxu0 0.0
  %1677 = vmatprep.subr.mxu0 0.0
  %1678 = vmatpush1.xpose.msra.mxu0 0.0
  %1679 = vmatprep.subr.mxu0 0.0
  %1680 = vmatpush1.xpose.msra.mxu0 0.0
  %1681 = vmatprep.subr.mxu0 0.0
  %1682 = vmatpush1.xpose.msra.mxu0 0.0
  %1683 = vmatprep.subr.mxu0 0.0
  %1684 = vmatpush1.xpose.msra.mxu0 0.0
  %1685 = vmatprep.subr.mxu0 0.0
  %1686 = vmatpush1.xpose.msra.mxu0 0.0
  %1687 = vmatprep.subr.mxu0 0.0
  %1688 = vmatpush1.xpose.msra.mxu0 0.0
  %1689 = vmatprep.subr.mxu0 0.0
  %1690 = vmatpush1.xpose.msra.mxu0 0.0
  %1691 = vmatprep.subr.mxu0 0.0
  %1692 = vmatpush1.xpose.msra.mxu0 0.0
  %1693 = vmatprep.subr.mxu0 0.0
  %1694 = vmatpush1.xpose.msra.mxu0 0.0
  %1695 = vmatprep.subr.mxu0 0.0
  %1696 = vmatpush1.xpose.msra.mxu0 0.0
  %1697 = vmatprep.mubr.f32.mxu0 0.0
  %1698 = vmatmul.mubr.f32.gmra.mrb[0].mxu0 %v1614
  %v1699 = vpop.f32.mrb[0].mxu0
  %v1700 = vadd.f32 0.0, %v1699
  %v1701 = vpop.f32.mrb[0].mxu0
  %1702 = vmatprep.mubr.f32.mxu0 0.0
  %1703 = vmatmul.mubr.f32.gmra.mrb[0].mxu0 %v1617
  %v1704 = vpop.f32.mrb[0].mxu0
  %v1705 = vadd.f32 0.0, %v1704
  %v1706 = vpop.f32.mrb[0].mxu0
  %1707 = vmatprep.mubr.f32.mxu0 0.0
  %1708 = vmatmul.mubr.f32.gmra.mrb[0].mxu0 %v1620
  %v1709 = vpop.f32.mrb[0].mxu0
  %v1710 = vadd.f32 0.0, %v1709
  %v1711 = vpop.f32.mrb[0].mxu0
  %1712 = vmatprep.mubr.f32.mxu0 0.0
  %1713 = vmatmul.mubr.f32.gmra.mrb[0].mxu0 %v1623
  %v1714 = vpop.f32.mrb[0].mxu0
  %v1715 = vadd.f32 0.0, %v1714
  %v1716 = vpop.f32.mrb[0].mxu0
  %1717 = vdwg.mxu0
  %v1718 = vadd.f32 %v1431, %v1700
  %v1719 = vadd.f32 %v1432, %v1705
  %v1720 = vadd.f32 %v1433, %v1710
  %v1721 = vadd.f32 %v1434, %v1715
  %1722 = vrot.lane.b32.xlu0 %v41, 64
  %v1723 = vpop.permute.xlu0 %1722
  %v1725 = vadd.f32 %v1718, %v1723
  %v1726 = vadd.f32 %v1719, %v1723
  %v1727 = vadd.f32 %v1720, %v1723
  %v1728 = vadd.f32 %v1721, %v1723
  %v1729 = vsel %vm124, %v1725, 0.0
  %1730 = vadd.xlane.f32.xlu0 %v1729
  %v1731 = vpop.xlane.xlu0 %1730
  %v1732 = vsel %vm124, %v1726, 0.0
  %1733 = vadd.xlane.f32.xlu0 %v1732
  %v1734 = vpop.xlane.xlu0 %1733
  %v1735 = vsel %vm124, %v1727, 0.0
  %1736 = vadd.xlane.f32.xlu0 %v1735
  %v1737 = vpop.xlane.xlu0 %1736
  %v1738 = vsel %vm124, %v1728, 0.0
  %1739 = vadd.xlane.f32.xlu0 %v1738
  %v1740 = vpop.xlane.xlu0 %1739
  %v1741 = vmul.f32 %v1731, %v246
  %v1742 = vmul.f32 %v1734, %v246
  %v1743 = vmul.f32 %v1737, %v246
  %v1744 = vmul.f32 %v1740, %v246
  %v1745 = vsub.f32 %v1725, %v1741
  %v1746 = vsub.f32 %v1726, %v1742
  %v1747 = vsub.f32 %v1727, %v1743
  %v1748 = vsub.f32 %v1728, %v1744
  %v1749 = vmul.f32 %v1745, %v1745
  %v1750 = vmul.f32 %v1746, %v1746
  %v1751 = vmul.f32 %v1747, %v1747
  %v1752 = vmul.f32 %v1748, %v1748
  %v1753 = vsel %vm124, %v1749, 0.0
  %1754 = vadd.xlane.f32.xlu0 %v1753
  %v1755 = vpop.xlane.xlu0 %1754
  %v1756 = vsel %vm124, %v1750, 0.0
  %1757 = vadd.xlane.f32.xlu0 %v1756
  %v1758 = vpop.xlane.xlu0 %1757
  %v1759 = vsel %vm124, %v1751, 0.0
  %1760 = vadd.xlane.f32.xlu0 %v1759
  %v1761 = vpop.xlane.xlu0 %1760
  %v1762 = vsel %vm124, %v1752, 0.0
  %1763 = vadd.xlane.f32.xlu0 %v1762
  %v1764 = vpop.xlane.xlu0 %1763
  %v1765 = vmul.f32 %v1755, %v246
  %v1766 = vmul.f32 %v1758, %v246
  %v1767 = vmul.f32 %v1761, %v246
  %v1768 = vmul.f32 %v1764, %v246
  %v1769 = vadd.f32 %v1765, 1e-05
  %v1770 = vadd.f32 %v1766, 1e-05
  %v1771 = vadd.f32 %v1767, 1e-05
  %v1772 = vadd.f32 %v1768, 1e-05
  %v1773 = vrsqrt.pop %v1769
  %v1774 = vrsqrt.pop %v1770
  %v1775 = vrsqrt.pop %v1771
  %v1776 = vrsqrt.pop %v1772
  %v1777 = vmul.f32 %v1745, %v1773
  %v1778 = vmul.f32 %v1746, %v1774
  %v1779 = vmul.f32 %v1747, %v1775
  %v1780 = vmul.f32 %v1748, %v1776
  %v1781 = vmul.f32 %v1777, %v289
  %v1782 = vmul.f32 %v1778, %v289
  %v1783 = vmul.f32 %v1779, %v289
  %v1784 = vmul.f32 %v1780, %v289
  %v1785 = vadd.f32 %v1781, %v296
  %v1786 = vadd.f32 %v1782, %v296
  %v1787 = vadd.f32 %v1783, %v296
  %v1788 = vadd.f32 %v1784, %v296
  %v1790 = vsel %vm124, %v1785, 0
  %v1793 = vsel %vm124, %v1786, 0
  %v1796 = vsel %vm124, %v1787, 0
  %v1799 = vsel %vm124, %v1788, 0
  %1801 = vmatprep.subr.mxu0 0.0
  %1802 = vmatpush1.msra.mxu0 %v22
  %1803 = vmatprep.subr.mxu0 0.0
  %1804 = vmatpush1.msra.mxu0 %v23
  %1805 = vmatprep.subr.mxu0 0.0
  %1806 = vmatpush1.msra.mxu0 %v24
  %1807 = vmatprep.subr.mxu0 0.0
  %1808 = vmatpush1.msra.mxu0 %v25
  %1809 = vmatprep.subr.mxu0 0.0
  %1810 = vmatpush1.msra.mxu0 0.0
  %1811 = vmatprep.subr.mxu0 0.0
  %1812 = vmatpush1.msra.mxu0 0.0
  %1813 = vmatprep.subr.mxu0 0.0
  %1814 = vmatpush1.msra.mxu0 0.0
  %1815 = vmatprep.subr.mxu0 0.0
  %1816 = vmatpush1.msra.mxu0 0.0
  %1817 = vmatprep.subr.mxu0 0.0
  %1818 = vmatpush1.msra.mxu0 0.0
  %1819 = vmatprep.subr.mxu0 0.0
  %1820 = vmatpush1.msra.mxu0 0.0
  %1821 = vmatprep.subr.mxu0 0.0
  %1822 = vmatpush1.msra.mxu0 0.0
  %1823 = vmatprep.subr.mxu0 0.0
  %1824 = vmatpush1.msra.mxu0 0.0
  %1825 = vmatprep.subr.mxu0 0.0
  %1826 = vmatpush1.msra.mxu0 0.0
  %1827 = vmatprep.subr.mxu0 0.0
  %1828 = vmatpush1.msra.mxu0 0.0
  %1829 = vmatprep.subr.mxu0 0.0
  %1830 = vmatpush1.msra.mxu0 0.0
  %1831 = vmatprep.subr.mxu0 0.0
  %1832 = vmatpush1.msra.mxu0 0.0
  %1833 = vmatprep.subr.mxu0 0.0
  %1834 = vmatpush1.msra.mxu0 0.0
  %1835 = vmatprep.subr.mxu0 0.0
  %1836 = vmatpush1.msra.mxu0 0.0
  %1837 = vmatprep.subr.mxu0 0.0
  %1838 = vmatpush1.msra.mxu0 0.0
  %1839 = vmatprep.subr.mxu0 0.0
  %1840 = vmatpush1.msra.mxu0 0.0
  %1841 = vmatprep.subr.mxu0 0.0
  %1842 = vmatpush1.msra.mxu0 0.0
  %1843 = vmatprep.subr.mxu0 0.0
  %1844 = vmatpush1.msra.mxu0 0.0
  %1845 = vmatprep.subr.mxu0 0.0
  %1846 = vmatpush1.msra.mxu0 0.0
  %1847 = vmatprep.subr.mxu0 0.0
  %1848 = vmatpush1.msra.mxu0 0.0
  %1849 = vmatprep.subr.mxu0 0.0
  %1850 = vmatpush1.msra.mxu0 0.0
  %1851 = vmatprep.subr.mxu0 0.0
  %1852 = vmatpush1.msra.mxu0 0.0
  %1853 = vmatprep.subr.mxu0 0.0
  %1854 = vmatpush1.msra.mxu0 0.0
  %1855 = vmatprep.subr.mxu0 0.0
  %1856 = vmatpush1.msra.mxu0 0.0
  %1857 = vmatprep.subr.mxu0 0.0
  %1858 = vmatpush1.msra.mxu0 0.0
  %1859 = vmatprep.subr.mxu0 0.0
  %1860 = vmatpush1.msra.mxu0 0.0
  %1861 = vmatprep.subr.mxu0 0.0
  %1862 = vmatpush1.msra.mxu0 0.0
  %1863 = vmatprep.subr.mxu0 0.0
  %1864 = vmatpush1.msra.mxu0 0.0
  %1865 = vmatprep.mubr.f32.mxu0 0.0
  %1866 = vmatmul.mubr.f32.gmra.mrb[0].mxu0 %v1790
  %v1867 = vpop.f32.mrb[0].mxu0
  %v1868 = vadd.f32 %v38, %v1867
  %v1869 = vpop.f32.mrb[0].mxu0
  %1870 = vmatprep.mubr.f32.mxu0 0.0
  %1871 = vmatmul.mubr.f32.gmra.mrb[0].mxu0 %v1793
  %v1872 = vpop.f32.mrb[0].mxu0
  %v1873 = vadd.f32 %v38, %v1872
  %v1874 = vpop.f32.mrb[0].mxu0
  %1875 = vmatprep.mubr.f32.mxu0 0.0
  %1876 = vmatmul.mubr.f32.gmra.mrb[0].mxu0 %v1796
  %v1877 = vpop.f32.mrb[0].mxu0
  %v1878 = vadd.f32 %v38, %v1877
  %v1879 = vpop.f32.mrb[0].mxu0
  %1880 = vmatprep.mubr.f32.mxu0 0.0
  %1881 = vmatmul.mubr.f32.gmra.mrb[0].mxu0 %v1799
  %v1882 = vpop.f32.mrb[0].mxu0
  %v1883 = vadd.f32 %v38, %v1882
  %v1884 = vpop.f32.mrb[0].mxu0
  %1885 = vdwg.mxu0
  %v1886 = vmul.f32 %v1868, %v432
  %v1887 = vmul.f32 %v1873, %v434
  %v1888 = vmul.f32 %v1878, %v436
  %v1889 = vmul.f32 %v1883, %v438
  %v1890 = vmul.f32 %v1868, %v440
  %v1891 = vmul.f32 %v1873, %v442
  %v1892 = vmul.f32 %v1878, %v444
  %v1893 = vmul.f32 %v1883, %v446
  %v1894 = vmul.f32 %v1868, %v448
  %v1895 = vmul.f32 %v1873, %v450
  %v1896 = vmul.f32 %v1878, %v452
  %v1897 = vmul.f32 %v1883, %v454
  %v1898 = vmul.f32 %v1868, %v456
  %v1899 = vmul.f32 %v1873, %v458
  %v1900 = vmul.f32 %v1878, %v460
  %v1901 = vmul.f32 %v1883, %v462
  %v1902 = vmul.f32 %v1868, %v464
  %v1903 = vmul.f32 %v1873, %v466
  %v1904 = vmul.f32 %v1878, %v468
  %v1905 = vmul.f32 %v1883, %v470
  %v1906 = vmul.f32 %v1868, %v472
  %v1907 = vmul.f32 %v1873, %v474
  %v1908 = vmul.f32 %v1878, %v476
  %v1909 = vmul.f32 %v1883, %v478
  %v1910 = vmul.f32 %v1868, %v480
  %v1911 = vmul.f32 %v1873, %v482
  %v1912 = vmul.f32 %v1878, %v484
  %v1913 = vmul.f32 %v1883, %v486
  %v1914 = vmul.f32 %v1868, %v488
  %v1915 = vmul.f32 %v1873, %v490
  %v1916 = vmul.f32 %v1878, %v492
  %v1917 = vmul.f32 %v1883, %v494
  %v1918 = vmul.f32 %v1868, %v560
  %v1919 = vmul.f32 %v1873, %v562
  %v1920 = vmul.f32 %v1878, %v564
  %v1921 = vmul.f32 %v1883, %v566
  %v1922 = vmul.f32 %v1868, %v568
  %v1923 = vmul.f32 %v1873, %v570
  %v1924 = vmul.f32 %v1878, %v572
  %v1925 = vmul.f32 %v1883, %v574
  %v1926 = vmul.f32 %v1868, %v576
  %v1927 = vmul.f32 %v1873, %v578
  %v1928 = vmul.f32 %v1878, %v580
  %v1929 = vmul.f32 %v1883, %v582
  %v1930 = vmul.f32 %v1868, %v584
  %v1931 = vmul.f32 %v1873, %v586
  %v1932 = vmul.f32 %v1878, %v588
  %v1933 = vmul.f32 %v1883, %v590
  %v1934 = vmul.f32 %v1868, %v592
  %v1935 = vmul.f32 %v1873, %v594
  %v1936 = vmul.f32 %v1878, %v596
  %v1937 = vmul.f32 %v1883, %v598
  %v1938 = vmul.f32 %v1868, %v600
  %v1939 = vmul.f32 %v1873, %v602
  %v1940 = vmul.f32 %v1878, %v604
  %v1941 = vmul.f32 %v1883, %v606
  %v1942 = vmul.f32 %v1868, %v608
  %v1943 = vmul.f32 %v1873, %v610
  %v1944 = vmul.f32 %v1878, %v612
  %v1945 = vmul.f32 %v1883, %v614
  %v1946 = vmul.f32 %v1868, %v616
  %v1947 = vmul.f32 %v1873, %v618
  %v1948 = vmul.f32 %v1878, %v620
  %v1949 = vmul.f32 %v1883, %v622
  %1982 = vrot.lane.b32.xlu0 %v1886, 96
  %v1983 = vpop.permute.xlu0 %1982
  %1984 = vrot.lane.b32.xlu0 %v1887, 96
  %v1985 = vpop.permute.xlu0 %1984
  %1986 = vrot.lane.b32.xlu0 %v1888, 96
  %v1987 = vpop.permute.xlu0 %1986
  %1988 = vrot.lane.b32.xlu0 %v1889, 96
  %v1989 = vpop.permute.xlu0 %1988
  %1990 = vrot.lane.b32.xlu0 %v1890, 96
  %v1991 = vpop.permute.xlu0 %1990
  %1992 = vrot.lane.b32.xlu0 %v1891, 96
  %v1993 = vpop.permute.xlu0 %1992
  %1994 = vrot.lane.b32.xlu0 %v1892, 96
  %v1995 = vpop.permute.xlu0 %1994
  %1996 = vrot.lane.b32.xlu0 %v1893, 96
  %v1997 = vpop.permute.xlu0 %1996
  %1998 = vrot.lane.b32.xlu0 %v1894, 96
  %v1999 = vpop.permute.xlu0 %1998
  %2000 = vrot.lane.b32.xlu0 %v1895, 96
  %v2001 = vpop.permute.xlu0 %2000
  %2002 = vrot.lane.b32.xlu0 %v1896, 96
  %v2003 = vpop.permute.xlu0 %2002
  %2004 = vrot.lane.b32.xlu0 %v1897, 96
  %v2005 = vpop.permute.xlu0 %2004
  %2006 = vrot.lane.b32.xlu0 %v1898, 96
  %v2007 = vpop.permute.xlu0 %2006
  %2008 = vrot.lane.b32.xlu0 %v1899, 96
  %v2009 = vpop.permute.xlu0 %2008
  %2010 = vrot.lane.b32.xlu0 %v1900, 96
  %v2011 = vpop.permute.xlu0 %2010
  %2012 = vrot.lane.b32.xlu0 %v1901, 96
  %v2013 = vpop.permute.xlu0 %2012
  %2014 = vrot.lane.b32.xlu0 %v1902, 96
  %v2015 = vpop.permute.xlu0 %2014
  %2016 = vrot.lane.b32.xlu0 %v1903, 96
  %v2017 = vpop.permute.xlu0 %2016
  %2018 = vrot.lane.b32.xlu0 %v1904, 96
  %v2019 = vpop.permute.xlu0 %2018
  %2020 = vrot.lane.b32.xlu0 %v1905, 96
  %v2021 = vpop.permute.xlu0 %2020
  %2022 = vrot.lane.b32.xlu0 %v1906, 96
  %v2023 = vpop.permute.xlu0 %2022
  %2024 = vrot.lane.b32.xlu0 %v1907, 96
  %v2025 = vpop.permute.xlu0 %2024
  %2026 = vrot.lane.b32.xlu0 %v1908, 96
  %v2027 = vpop.permute.xlu0 %2026
  %2028 = vrot.lane.b32.xlu0 %v1909, 96
  %v2029 = vpop.permute.xlu0 %2028
  %2030 = vrot.lane.b32.xlu0 %v1910, 96
  %v2031 = vpop.permute.xlu0 %2030
  %2032 = vrot.lane.b32.xlu0 %v1911, 96
  %v2033 = vpop.permute.xlu0 %2032
  %2034 = vrot.lane.b32.xlu0 %v1912, 96
  %v2035 = vpop.permute.xlu0 %2034
  %2036 = vrot.lane.b32.xlu0 %v1913, 96
  %v2037 = vpop.permute.xlu0 %2036
  %2038 = vrot.lane.b32.xlu0 %v1914, 96
  %v2039 = vpop.permute.xlu0 %2038
  %2040 = vrot.lane.b32.xlu0 %v1915, 96
  %v2041 = vpop.permute.xlu0 %2040
  %2042 = vrot.lane.b32.xlu0 %v1916, 96
  %v2043 = vpop.permute.xlu0 %2042
  %2044 = vrot.lane.b32.xlu0 %v1917, 96
  %v2045 = vpop.permute.xlu0 %2044
  %v2047 = vsel %vm124, %v1868, 0
  %v2050 = vsel %vm124, %v1873, 0
  %v2053 = vsel %vm124, %v1878, 0
  %v2056 = vsel %vm124, %v1883, 0
  %v2058 = vsel %vm124, %v1983, 0
  %v2060 = vsel %vm124, %v1985, 0
  %v2062 = vsel %vm124, %v1987, 0
  %v2064 = vsel %vm124, %v1989, 0
  %v2066 = vsel %vm124, %v1991, 0
  %v2068 = vsel %vm124, %v1993, 0
  %v2070 = vsel %vm124, %v1995, 0
  %v2072 = vsel %vm124, %v1997, 0
  %v2074 = vsel %vm124, %v1999, 0
  %v2076 = vsel %vm124, %v2001, 0
  %v2078 = vsel %vm124, %v2003, 0
  %v2080 = vsel %vm124, %v2005, 0
  %v2082 = vsel %vm124, %v2007, 0
  %v2084 = vsel %vm124, %v2009, 0
  %v2086 = vsel %vm124, %v2011, 0
  %v2088 = vsel %vm124, %v2013, 0
  %v2090 = vsel %vm124, %v2015, 0
  %v2092 = vsel %vm124, %v2017, 0
  %v2094 = vsel %vm124, %v2019, 0
  %v2096 = vsel %vm124, %v2021, 0
  %v2098 = vsel %vm124, %v2023, 0
  %v2100 = vsel %vm124, %v2025, 0
  %v2102 = vsel %vm124, %v2027, 0
  %v2104 = vsel %vm124, %v2029, 0
  %v2106 = vsel %vm124, %v2031, 0
  %v2108 = vsel %vm124, %v2033, 0
  %v2110 = vsel %vm124, %v2035, 0
  %v2112 = vsel %vm124, %v2037, 0
  %v2114 = vsel %vm124, %v2039, 0
  %v2116 = vsel %vm124, %v2041, 0
  %v2118 = vsel %vm124, %v2043, 0
  %v2120 = vsel %vm124, %v2045, 0
  %2122 = vmatprep.subr.mxu0 0.0
  %2123 = vmatpush1.xpose.msra.mxu0 %v2058
  %2124 = vmatprep.subr.mxu0 0.0
  %2125 = vmatpush1.xpose.msra.mxu0 %v2060
  %2126 = vmatprep.subr.mxu0 0.0
  %2127 = vmatpush1.xpose.msra.mxu0 %v2062
  %2128 = vmatprep.subr.mxu0 0.0
  %2129 = vmatpush1.xpose.msra.mxu0 %v2064
  %2130 = vmatprep.subr.mxu0 0.0
  %2131 = vmatpush1.xpose.msra.mxu0 %v2066
  %2132 = vmatprep.subr.mxu0 0.0
  %2133 = vmatpush1.xpose.msra.mxu0 %v2068
  %2134 = vmatprep.subr.mxu0 0.0
  %2135 = vmatpush1.xpose.msra.mxu0 %v2070
  %2136 = vmatprep.subr.mxu0 0.0
  %2137 = vmatpush1.xpose.msra.mxu0 %v2072
  %2138 = vmatprep.subr.mxu0 0.0
  %2139 = vmatpush1.xpose.msra.mxu0 %v2074
  %2140 = vmatprep.subr.mxu0 0.0
  %2141 = vmatpush1.xpose.msra.mxu0 %v2076
  %2142 = vmatprep.subr.mxu0 0.0
  %2143 = vmatpush1.xpose.msra.mxu0 %v2078
  %2144 = vmatprep.subr.mxu0 0.0
  %2145 = vmatpush1.xpose.msra.mxu0 %v2080
  %2146 = vmatprep.subr.mxu0 0.0
  %2147 = vmatpush1.xpose.msra.mxu0 %v2082
  %2148 = vmatprep.subr.mxu0 0.0
  %2149 = vmatpush1.xpose.msra.mxu0 %v2084
  %2150 = vmatprep.subr.mxu0 0.0
  %2151 = vmatpush1.xpose.msra.mxu0 %v2086
  %2152 = vmatprep.subr.mxu0 0.0
  %2153 = vmatpush1.xpose.msra.mxu0 %v2088
  %2154 = vmatprep.subr.mxu0 0.0
  %2155 = vmatpush1.xpose.msra.mxu0 %v2090
  %2156 = vmatprep.subr.mxu0 0.0
  %2157 = vmatpush1.xpose.msra.mxu0 %v2092
  %2158 = vmatprep.subr.mxu0 0.0
  %2159 = vmatpush1.xpose.msra.mxu0 %v2094
  %2160 = vmatprep.subr.mxu0 0.0
  %2161 = vmatpush1.xpose.msra.mxu0 %v2096
  %2162 = vmatprep.subr.mxu0 0.0
  %2163 = vmatpush1.xpose.msra.mxu0 %v2098
  %2164 = vmatprep.subr.mxu0 0.0
  %2165 = vmatpush1.xpose.msra.mxu0 %v2100
  %2166 = vmatprep.subr.mxu0 0.0
  %2167 = vmatpush1.xpose.msra.mxu0 %v2102
  %2168 = vmatprep.subr.mxu0 0.0
  %2169 = vmatpush1.xpose.msra.mxu0 %v2104
  %2170 = vmatprep.subr.mxu0 0.0
  %2171 = vmatpush1.xpose.msra.mxu0 %v2106
  %2172 = vmatprep.subr.mxu0 0.0
  %2173 = vmatpush1.xpose.msra.mxu0 %v2108
  %2174 = vmatprep.subr.mxu0 0.0
  %2175 = vmatpush1.xpose.msra.mxu0 %v2110
  %2176 = vmatprep.subr.mxu0 0.0
  %2177 = vmatpush1.xpose.msra.mxu0 %v2112
  %2178 = vmatprep.subr.mxu0 0.0
  %2179 = vmatpush1.xpose.msra.mxu0 %v2114
  %2180 = vmatprep.subr.mxu0 0.0
  %2181 = vmatpush1.xpose.msra.mxu0 %v2116
  %2182 = vmatprep.subr.mxu0 0.0
  %2183 = vmatpush1.xpose.msra.mxu0 %v2118
  %2184 = vmatprep.subr.mxu0 0.0
  %2185 = vmatpush1.xpose.msra.mxu0 %v2120
  %2186 = vmatprep.mubr.f32.mxu0 0.0
  %2187 = vmatmul.mubr.f32.gmra.mrb[0].mxu0 %v2047
  %v2188 = vpop.f32.mrb[0].mxu0
  %v2189 = vadd.f32 0.0, %v2188
  %v2190 = vpop.f32.mrb[0].mxu0
  %v2191 = vadd.f32 0.0, %v2190
  %2192 = vmatprep.mubr.f32.mxu0 0.0
  %2193 = vmatmul.mubr.f32.gmra.mrb[0].mxu0 %v2050
  %v2194 = vpop.f32.mrb[0].mxu0
  %v2195 = vadd.f32 0.0, %v2194
  %v2196 = vpop.f32.mrb[0].mxu0
  %v2197 = vadd.f32 0.0, %v2196
  %2198 = vmatprep.mubr.f32.mxu0 0.0
  %2199 = vmatmul.mubr.f32.gmra.mrb[0].mxu0 %v2053
  %v2200 = vpop.f32.mrb[0].mxu0
  %v2201 = vadd.f32 0.0, %v2200
  %v2202 = vpop.f32.mrb[0].mxu0
  %v2203 = vadd.f32 0.0, %v2202
  %2204 = vmatprep.mubr.f32.mxu0 0.0
  %2205 = vmatmul.mubr.f32.gmra.mrb[0].mxu0 %v2056
  %v2206 = vpop.f32.mrb[0].mxu0
  %v2207 = vadd.f32 0.0, %v2206
  %v2208 = vpop.f32.mrb[0].mxu0
  %v2209 = vadd.f32 0.0, %v2208
  %2210 = vdwg.mxu0
  %v2211 = vsel %vm948, %v2189, -1e+30
  %v2212 = vsel %vm949, %v2191, -1e+30
  %v2213 = vsel %vm950, %v2195, -1e+30
  %v2214 = vsel %vm951, %v2197, -1e+30
  %v2215 = vsel %vm952, %v2201, -1e+30
  %v2216 = vsel %vm953, %v2203, -1e+30
  %v2217 = vsel %vm954, %v2207, -1e+30
  %v2218 = vsel %vm955, %v2209, -1e+30
  %v2219 = vmax.f32 %v2211, %v2212
  %2220 = vmax.xlane.f32.xlu0 %v2219
  %v2221 = vpop.xlane.xlu0 %2220
  %v2222 = vmax.f32 %v2213, %v2214
  %2223 = vmax.xlane.f32.xlu0 %v2222
  %v2224 = vpop.xlane.xlu0 %2223
  %v2225 = vmax.f32 %v2215, %v2216
  %2226 = vmax.xlane.f32.xlu0 %v2225
  %v2227 = vpop.xlane.xlu0 %2226
  %v2228 = vmax.f32 %v2217, %v2218
  %2229 = vmax.xlane.f32.xlu0 %v2228
  %v2230 = vpop.xlane.xlu0 %2229
  %v2231 = vsub.f32 %v2211, %v2221
  %v2232 = vsub.f32 %v2212, %v2221
  %v2233 = vsub.f32 %v2213, %v2224
  %v2234 = vsub.f32 %v2214, %v2224
  %v2235 = vsub.f32 %v2215, %v2227
  %v2236 = vsub.f32 %v2216, %v2227
  %v2237 = vsub.f32 %v2217, %v2230
  %v2238 = vsub.f32 %v2218, %v2230
  %v2239 = vmul.f32 %v2231, 1.442695
  %v2240 = vpow.pop %v2239
  %v2241 = vmul.f32 %v2232, 1.442695
  %v2242 = vpow.pop %v2241
  %v2243 = vmul.f32 %v2233, 1.442695
  %v2244 = vpow.pop %v2243
  %v2245 = vmul.f32 %v2234, 1.442695
  %v2246 = vpow.pop %v2245
  %v2247 = vmul.f32 %v2235, 1.442695
  %v2248 = vpow.pop %v2247
  %v2249 = vmul.f32 %v2236, 1.442695
  %v2250 = vpow.pop %v2249
  %v2251 = vmul.f32 %v2237, 1.442695
  %v2252 = vpow.pop %v2251
  %v2253 = vmul.f32 %v2238, 1.442695
  %v2254 = vpow.pop %v2253
  %v2255 = vmul.f32 %v2240, %v14
  %v2256 = vmul.f32 %v2242, %v15
  %v2257 = vmul.f32 %v2244, %v16
  %v2258 = vmul.f32 %v2246, %v17
  %v2259 = vmul.f32 %v2248, %v18
  %v2260 = vmul.f32 %v2250, %v19
  %v2261 = vmul.f32 %v2252, %v20
  %v2262 = vmul.f32 %v2254, %v21
  %2295 = vrot.lane.b32.xlu0 %v1918, 64
  %v2296 = vpop.permute.xlu0 %2295
  %2297 = vrot.lane.b32.xlu0 %v1919, 64
  %v2298 = vpop.permute.xlu0 %2297
  %2299 = vrot.lane.b32.xlu0 %v1920, 64
  %v2300 = vpop.permute.xlu0 %2299
  %2301 = vrot.lane.b32.xlu0 %v1921, 64
  %v2302 = vpop.permute.xlu0 %2301
  %2303 = vrot.lane.b32.xlu0 %v1922, 64
  %v2304 = vpop.permute.xlu0 %2303
  %2305 = vrot.lane.b32.xlu0 %v1923, 64
  %v2306 = vpop.permute.xlu0 %2305
  %2307 = vrot.lane.b32.xlu0 %v1924, 64
  %v2308 = vpop.permute.xlu0 %2307
  %2309 = vrot.lane.b32.xlu0 %v1925, 64
  %v2310 = vpop.permute.xlu0 %2309
  %2311 = vrot.lane.b32.xlu0 %v1926, 64
  %v2312 = vpop.permute.xlu0 %2311
  %2313 = vrot.lane.b32.xlu0 %v1927, 64
  %v2314 = vpop.permute.xlu0 %2313
  %2315 = vrot.lane.b32.xlu0 %v1928, 64
  %v2316 = vpop.permute.xlu0 %2315
  %2317 = vrot.lane.b32.xlu0 %v1929, 64
  %v2318 = vpop.permute.xlu0 %2317
  %2319 = vrot.lane.b32.xlu0 %v1930, 64
  %v2320 = vpop.permute.xlu0 %2319
  %2321 = vrot.lane.b32.xlu0 %v1931, 64
  %v2322 = vpop.permute.xlu0 %2321
  %2323 = vrot.lane.b32.xlu0 %v1932, 64
  %v2324 = vpop.permute.xlu0 %2323
  %2325 = vrot.lane.b32.xlu0 %v1933, 64
  %v2326 = vpop.permute.xlu0 %2325
  %2327 = vrot.lane.b32.xlu0 %v1934, 64
  %v2328 = vpop.permute.xlu0 %2327
  %2329 = vrot.lane.b32.xlu0 %v1935, 64
  %v2330 = vpop.permute.xlu0 %2329
  %2331 = vrot.lane.b32.xlu0 %v1936, 64
  %v2332 = vpop.permute.xlu0 %2331
  %2333 = vrot.lane.b32.xlu0 %v1937, 64
  %v2334 = vpop.permute.xlu0 %2333
  %2335 = vrot.lane.b32.xlu0 %v1938, 64
  %v2336 = vpop.permute.xlu0 %2335
  %2337 = vrot.lane.b32.xlu0 %v1939, 64
  %v2338 = vpop.permute.xlu0 %2337
  %2339 = vrot.lane.b32.xlu0 %v1940, 64
  %v2340 = vpop.permute.xlu0 %2339
  %2341 = vrot.lane.b32.xlu0 %v1941, 64
  %v2342 = vpop.permute.xlu0 %2341
  %2343 = vrot.lane.b32.xlu0 %v1942, 64
  %v2344 = vpop.permute.xlu0 %2343
  %2345 = vrot.lane.b32.xlu0 %v1943, 64
  %v2346 = vpop.permute.xlu0 %2345
  %2347 = vrot.lane.b32.xlu0 %v1944, 64
  %v2348 = vpop.permute.xlu0 %2347
  %2349 = vrot.lane.b32.xlu0 %v1945, 64
  %v2350 = vpop.permute.xlu0 %2349
  %2351 = vrot.lane.b32.xlu0 %v1946, 64
  %v2352 = vpop.permute.xlu0 %2351
  %2353 = vrot.lane.b32.xlu0 %v1947, 64
  %v2354 = vpop.permute.xlu0 %2353
  %2355 = vrot.lane.b32.xlu0 %v1948, 64
  %v2356 = vpop.permute.xlu0 %2355
  %2357 = vrot.lane.b32.xlu0 %v1949, 64
  %v2358 = vpop.permute.xlu0 %2357
  %2391 = vmatprep.subr.mxu0 0.0
  %2392 = vmatpush1.msra.mxu0 %v2296
  %2393 = vmatprep.subr.mxu0 0.0
  %2394 = vmatpush1.msra.mxu0 %v2298
  %2395 = vmatprep.subr.mxu0 0.0
  %2396 = vmatpush1.msra.mxu0 %v2300
  %2397 = vmatprep.subr.mxu0 0.0
  %2398 = vmatpush1.msra.mxu0 %v2302
  %2399 = vmatprep.subr.mxu0 0.0
  %2400 = vmatpush1.msra.mxu0 %v2304
  %2401 = vmatprep.subr.mxu0 0.0
  %2402 = vmatpush1.msra.mxu0 %v2306
  %2403 = vmatprep.subr.mxu0 0.0
  %2404 = vmatpush1.msra.mxu0 %v2308
  %2405 = vmatprep.subr.mxu0 0.0
  %2406 = vmatpush1.msra.mxu0 %v2310
  %2407 = vmatprep.subr.mxu0 0.0
  %2408 = vmatpush1.msra.mxu0 %v2312
  %2409 = vmatprep.subr.mxu0 0.0
  %2410 = vmatpush1.msra.mxu0 %v2314
  %2411 = vmatprep.subr.mxu0 0.0
  %2412 = vmatpush1.msra.mxu0 %v2316
  %2413 = vmatprep.subr.mxu0 0.0
  %2414 = vmatpush1.msra.mxu0 %v2318
  %2415 = vmatprep.subr.mxu0 0.0
  %2416 = vmatpush1.msra.mxu0 %v2320
  %2417 = vmatprep.subr.mxu0 0.0
  %2418 = vmatpush1.msra.mxu0 %v2322
  %2419 = vmatprep.subr.mxu0 0.0
  %2420 = vmatpush1.msra.mxu0 %v2324
  %2421 = vmatprep.subr.mxu0 0.0
  %2422 = vmatpush1.msra.mxu0 %v2326
  %2423 = vmatprep.subr.mxu0 0.0
  %2424 = vmatpush1.msra.mxu0 %v2328
  %2425 = vmatprep.subr.mxu0 0.0
  %2426 = vmatpush1.msra.mxu0 %v2330
  %2427 = vmatprep.subr.mxu0 0.0
  %2428 = vmatpush1.msra.mxu0 %v2332
  %2429 = vmatprep.subr.mxu0 0.0
  %2430 = vmatpush1.msra.mxu0 %v2334
  %2431 = vmatprep.subr.mxu0 0.0
  %2432 = vmatpush1.msra.mxu0 %v2336
  %2433 = vmatprep.subr.mxu0 0.0
  %2434 = vmatpush1.msra.mxu0 %v2338
  %2435 = vmatprep.subr.mxu0 0.0
  %2436 = vmatpush1.msra.mxu0 %v2340
  %2437 = vmatprep.subr.mxu0 0.0
  %2438 = vmatpush1.msra.mxu0 %v2342
  %2439 = vmatprep.subr.mxu0 0.0
  %2440 = vmatpush1.msra.mxu0 %v2344
  %2441 = vmatprep.subr.mxu0 0.0
  %2442 = vmatpush1.msra.mxu0 %v2346
  %2443 = vmatprep.subr.mxu0 0.0
  %2444 = vmatpush1.msra.mxu0 %v2348
  %2445 = vmatprep.subr.mxu0 0.0
  %2446 = vmatpush1.msra.mxu0 %v2350
  %2447 = vmatprep.subr.mxu0 0.0
  %2448 = vmatpush1.msra.mxu0 %v2352
  %2449 = vmatprep.subr.mxu0 0.0
  %2450 = vmatpush1.msra.mxu0 %v2354
  %2451 = vmatprep.subr.mxu0 0.0
  %2452 = vmatpush1.msra.mxu0 %v2356
  %2453 = vmatprep.subr.mxu0 0.0
  %2454 = vmatpush1.msra.mxu0 %v2358
  %2455 = vmatprep.mubr.f32.mxu0 %v2256
  %2456 = vmatmul.mubr.f32.gmra.mrb[0].mxu0 %v2255
  %v2457 = vpop.f32.mrb[0].mxu0
  %v2458 = vadd.f32 0.0, %v2457
  %v2459 = vpop.f32.mrb[0].mxu0
  %2460 = vmatprep.mubr.f32.mxu0 %v2258
  %2461 = vmatmul.mubr.f32.gmra.mrb[0].mxu0 %v2257
  %v2462 = vpop.f32.mrb[0].mxu0
  %v2463 = vadd.f32 0.0, %v2462
  %v2464 = vpop.f32.mrb[0].mxu0
  %2465 = vmatprep.mubr.f32.mxu0 %v2260
  %2466 = vmatmul.mubr.f32.gmra.mrb[0].mxu0 %v2259
  %v2467 = vpop.f32.mrb[0].mxu0
  %v2468 = vadd.f32 0.0, %v2467
  %v2469 = vpop.f32.mrb[0].mxu0
  %2470 = vmatprep.mubr.f32.mxu0 %v2262
  %2471 = vmatmul.mubr.f32.gmra.mrb[0].mxu0 %v2261
  %v2472 = vpop.f32.mrb[0].mxu0
  %v2473 = vadd.f32 0.0, %v2472
  %v2474 = vpop.f32.mrb[0].mxu0
  %2475 = vdwg.mxu0
  %2476 = vmatprep.subr.mxu0 0.0
  %2477 = vmatpush1.msra.mxu0 %v42
  %2478 = vmatprep.subr.mxu0 0.0
  %2479 = vmatpush1.msra.mxu0 %v43
  %2480 = vmatprep.subr.mxu0 0.0
  %2481 = vmatpush1.msra.mxu0 %v44
  %2482 = vmatprep.subr.mxu0 0.0
  %2483 = vmatpush1.msra.mxu0 %v45
  %2484 = vmatprep.subr.mxu0 0.0
  %2485 = vmatpush1.msra.mxu0 %v46
  %2486 = vmatprep.subr.mxu0 0.0
  %2487 = vmatpush1.msra.mxu0 %v47
  %2488 = vmatprep.subr.mxu0 0.0
  %2489 = vmatpush1.msra.mxu0 %v48
  %2490 = vmatprep.subr.mxu0 0.0
  %2491 = vmatpush1.msra.mxu0 %v49
  %2492 = vmatprep.subr.mxu0 0.0
  %2493 = vmatpush1.msra.mxu0 %v50
  %2494 = vmatprep.subr.mxu0 0.0
  %2495 = vmatpush1.msra.mxu0 %v51
  %2496 = vmatprep.subr.mxu0 0.0
  %2497 = vmatpush1.msra.mxu0 %v52
  %2498 = vmatprep.subr.mxu0 0.0
  %2499 = vmatpush1.msra.mxu0 %v53
  %2500 = vmatprep.subr.mxu0 0.0
  %2501 = vmatpush1.msra.mxu0 %v54
  %2502 = vmatprep.subr.mxu0 0.0
  %2503 = vmatpush1.msra.mxu0 %v55
  %2504 = vmatprep.subr.mxu0 0.0
  %2505 = vmatpush1.msra.mxu0 %v56
  %2506 = vmatprep.subr.mxu0 0.0
  %2507 = vmatpush1.msra.mxu0 %v57
  %2508 = vmatprep.subr.mxu0 0.0
  %2509 = vmatpush1.msra.mxu0 %v58
  %2510 = vmatprep.subr.mxu0 0.0
  %2511 = vmatpush1.msra.mxu0 %v59
  %2512 = vmatprep.subr.mxu0 0.0
  %2513 = vmatpush1.msra.mxu0 %v60
  %2514 = vmatprep.subr.mxu0 0.0
  %2515 = vmatpush1.msra.mxu0 %v61
  %2516 = vmatprep.subr.mxu0 0.0
  %2517 = vmatpush1.msra.mxu0 %v62
  %2518 = vmatprep.subr.mxu0 0.0
  %2519 = vmatpush1.msra.mxu0 %v63
  %2520 = vmatprep.subr.mxu0 0.0
  %2521 = vmatpush1.msra.mxu0 %v64
  %2522 = vmatprep.subr.mxu0 0.0
  %2523 = vmatpush1.msra.mxu0 %v65
  %2524 = vmatprep.subr.mxu0 0.0
  %2525 = vmatpush1.msra.mxu0 %v66
  %2526 = vmatprep.subr.mxu0 0.0
  %2527 = vmatpush1.msra.mxu0 %v67
  %2528 = vmatprep.subr.mxu0 0.0
  %2529 = vmatpush1.msra.mxu0 %v68
  %2530 = vmatprep.subr.mxu0 0.0
  %2531 = vmatpush1.msra.mxu0 %v69
  %2532 = vmatprep.subr.mxu0 0.0
  %2533 = vmatpush1.msra.mxu0 %v70
  %2534 = vmatprep.subr.mxu0 0.0
  %2535 = vmatpush1.msra.mxu0 %v71
  %2536 = vmatprep.subr.mxu0 0.0
  %2537 = vmatpush1.msra.mxu0 %v72
  %2538 = vmatprep.subr.mxu0 0.0
  %2539 = vmatpush1.msra.mxu0 %v73
  %2540 = vmatprep.mubr.f32.mxu0 %v2256
  %2541 = vmatmul.mubr.f32.gmra.mrb[0].mxu0 %v2255
  %v2542 = vpop.f32.mrb[0].mxu0
  %v2543 = vadd.f32 0.0, %v2542
  %v2544 = vpop.f32.mrb[0].mxu0
  %2545 = vmatprep.mubr.f32.mxu0 %v2258
  %2546 = vmatmul.mubr.f32.gmra.mrb[0].mxu0 %v2257
  %v2547 = vpop.f32.mrb[0].mxu0
  %v2548 = vadd.f32 0.0, %v2547
  %v2549 = vpop.f32.mrb[0].mxu0
  %2550 = vmatprep.mubr.f32.mxu0 %v2260
  %2551 = vmatmul.mubr.f32.gmra.mrb[0].mxu0 %v2259
  %v2552 = vpop.f32.mrb[0].mxu0
  %v2553 = vadd.f32 0.0, %v2552
  %v2554 = vpop.f32.mrb[0].mxu0
  %2555 = vmatprep.mubr.f32.mxu0 %v2262
  %2556 = vmatmul.mubr.f32.gmra.mrb[0].mxu0 %v2261
  %v2557 = vpop.f32.mrb[0].mxu0
  %v2558 = vadd.f32 0.0, %v2557
  %v2559 = vpop.f32.mrb[0].mxu0
  %2560 = vdwg.mxu0
  %v2561 = vrcp.pop %v2543
  %v2562 = vmul.f32 %v2458, %v2561
  %v2563 = vrcp.pop %v2548
  %v2564 = vmul.f32 %v2463, %v2563
  %v2565 = vrcp.pop %v2553
  %v2566 = vmul.f32 %v2468, %v2565
  %v2567 = vrcp.pop %v2558
  %v2568 = vmul.f32 %v2473, %v2567
  %v2570 = vsel %vm124, %v2562, 0
  %v2573 = vsel %vm124, %v2564, 0
  %v2576 = vsel %vm124, %v2566, 0
  %v2579 = vsel %vm124, %v2568, 0
  %2581 = vmatprep.subr.mxu0 0.0
  %2582 = vmatpush1.msra.mxu0 %v1319
  %2583 = vmatprep.subr.mxu0 0.0
  %2584 = vmatpush1.msra.mxu0 %v1321
  %2585 = vmatprep.subr.mxu0 0.0
  %2586 = vmatpush1.msra.mxu0 %v1323
  %2587 = vmatprep.subr.mxu0 0.0
  %2588 = vmatpush1.msra.mxu0 %v1325
  %2589 = vmatprep.subr.mxu0 0.0
  %2590 = vmatpush1.msra.mxu0 0.0
  %2591 = vmatprep.subr.mxu0 0.0
  %2592 = vmatpush1.msra.mxu0 0.0
  %2593 = vmatprep.subr.mxu0 0.0
  %2594 = vmatpush1.msra.mxu0 0.0
  %2595 = vmatprep.subr.mxu0 0.0
  %2596 = vmatpush1.msra.mxu0 0.0
  %2597 = vmatprep.subr.mxu0 0.0
  %2598 = vmatpush1.msra.mxu0 0.0
  %2599 = vmatprep.subr.mxu0 0.0
  %2600 = vmatpush1.msra.mxu0 0.0
  %2601 = vmatprep.subr.mxu0 0.0
  %2602 = vmatpush1.msra.mxu0 0.0
  %2603 = vmatprep.subr.mxu0 0.0
  %2604 = vmatpush1.msra.mxu0 0.0
  %2605 = vmatprep.subr.mxu0 0.0
  %2606 = vmatpush1.msra.mxu0 0.0
  %2607 = vmatprep.subr.mxu0 0.0
  %2608 = vmatpush1.msra.mxu0 0.0
  %2609 = vmatprep.subr.mxu0 0.0
  %2610 = vmatpush1.msra.mxu0 0.0
  %2611 = vmatprep.subr.mxu0 0.0
  %2612 = vmatpush1.msra.mxu0 0.0
  %2613 = vmatprep.subr.mxu0 0.0
  %2614 = vmatpush1.msra.mxu0 0.0
  %2615 = vmatprep.subr.mxu0 0.0
  %2616 = vmatpush1.msra.mxu0 0.0
  %2617 = vmatprep.subr.mxu0 0.0
  %2618 = vmatpush1.msra.mxu0 0.0
  %2619 = vmatprep.subr.mxu0 0.0
  %2620 = vmatpush1.msra.mxu0 0.0
  %2621 = vmatprep.subr.mxu0 0.0
  %2622 = vmatpush1.msra.mxu0 0.0
  %2623 = vmatprep.subr.mxu0 0.0
  %2624 = vmatpush1.msra.mxu0 0.0
  %2625 = vmatprep.subr.mxu0 0.0
  %2626 = vmatpush1.msra.mxu0 0.0
  %2627 = vmatprep.subr.mxu0 0.0
  %2628 = vmatpush1.msra.mxu0 0.0
  %2629 = vmatprep.subr.mxu0 0.0
  %2630 = vmatpush1.msra.mxu0 0.0
  %2631 = vmatprep.subr.mxu0 0.0
  %2632 = vmatpush1.msra.mxu0 0.0
  %2633 = vmatprep.subr.mxu0 0.0
  %2634 = vmatpush1.msra.mxu0 0.0
  %2635 = vmatprep.subr.mxu0 0.0
  %2636 = vmatpush1.msra.mxu0 0.0
  %2637 = vmatprep.subr.mxu0 0.0
  %2638 = vmatpush1.msra.mxu0 0.0
  %2639 = vmatprep.subr.mxu0 0.0
  %2640 = vmatpush1.msra.mxu0 0.0
  %2641 = vmatprep.subr.mxu0 0.0
  %2642 = vmatpush1.msra.mxu0 0.0
  %2643 = vmatprep.subr.mxu0 0.0
  %2644 = vmatpush1.msra.mxu0 0.0
  %2645 = vmatprep.mubr.f32.mxu0 0.0
  %2646 = vmatmul.mubr.f32.gmra.mrb[0].mxu0 %v2570
  %v2647 = vpop.f32.mrb[0].mxu0
  %v2648 = vadd.f32 0.0, %v2647
  %v2649 = vpop.f32.mrb[0].mxu0
  %2650 = vmatprep.mubr.f32.mxu0 0.0
  %2651 = vmatmul.mubr.f32.gmra.mrb[0].mxu0 %v2573
  %v2652 = vpop.f32.mrb[0].mxu0
  %v2653 = vadd.f32 0.0, %v2652
  %v2654 = vpop.f32.mrb[0].mxu0
  %2655 = vmatprep.mubr.f32.mxu0 0.0
  %2656 = vmatmul.mubr.f32.gmra.mrb[0].mxu0 %v2576
  %v2657 = vpop.f32.mrb[0].mxu0
  %v2658 = vadd.f32 0.0, %v2657
  %v2659 = vpop.f32.mrb[0].mxu0
  %2660 = vmatprep.mubr.f32.mxu0 0.0
  %2661 = vmatmul.mubr.f32.gmra.mrb[0].mxu0 %v2579
  %v2662 = vpop.f32.mrb[0].mxu0
  %v2663 = vadd.f32 0.0, %v2662
  %v2664 = vpop.f32.mrb[0].mxu0
  %2665 = vdwg.mxu0
  %v2666 = vadd.f32 %v1725, %v2648
  %v2667 = vadd.f32 %v1726, %v2653
  %v2668 = vadd.f32 %v1727, %v2658
  %v2669 = vadd.f32 %v1728, %v2663
  %v2670 = vadd.f32 %v2666, %v40
  %v2671 = vadd.f32 %v2667, %v40
  %v2672 = vadd.f32 %v2668, %v40
  %v2673 = vadd.f32 %v2669, %v40
  %v2674 = vsel %vm124, %v2670, 0.0
  %2675 = vadd.xlane.f32.xlu0 %v2674
  %v2676 = vpop.xlane.xlu0 %2675
  %v2677 = vsel %vm124, %v2671, 0.0
  %2678 = vadd.xlane.f32.xlu0 %v2677
  %v2679 = vpop.xlane.xlu0 %2678
  %v2680 = vsel %vm124, %v2672, 0.0
  %2681 = vadd.xlane.f32.xlu0 %v2680
  %v2682 = vpop.xlane.xlu0 %2681
  %v2683 = vsel %vm124, %v2673, 0.0
  %2684 = vadd.xlane.f32.xlu0 %v2683
  %v2685 = vpop.xlane.xlu0 %2684
  %v2686 = vmul.f32 %v2676, %v246
  %v2687 = vmul.f32 %v2679, %v246
  %v2688 = vmul.f32 %v2682, %v246
  %v2689 = vmul.f32 %v2685, %v246
  %v2690 = vsub.f32 %v2670, %v2686
  %v2691 = vsub.f32 %v2671, %v2687
  %v2692 = vsub.f32 %v2672, %v2688
  %v2693 = vsub.f32 %v2673, %v2689
  %v2694 = vmul.f32 %v2690, %v2690
  %v2695 = vmul.f32 %v2691, %v2691
  %v2696 = vmul.f32 %v2692, %v2692
  %v2697 = vmul.f32 %v2693, %v2693
  %v2698 = vsel %vm124, %v2694, 0.0
  %2699 = vadd.xlane.f32.xlu0 %v2698
  %v2700 = vpop.xlane.xlu0 %2699
  %v2701 = vsel %vm124, %v2695, 0.0
  %2702 = vadd.xlane.f32.xlu0 %v2701
  %v2703 = vpop.xlane.xlu0 %2702
  %v2704 = vsel %vm124, %v2696, 0.0
  %2705 = vadd.xlane.f32.xlu0 %v2704
  %v2706 = vpop.xlane.xlu0 %2705
  %v2707 = vsel %vm124, %v2697, 0.0
  %2708 = vadd.xlane.f32.xlu0 %v2707
  %v2709 = vpop.xlane.xlu0 %2708
  %v2710 = vmul.f32 %v2700, %v246
  %v2711 = vmul.f32 %v2703, %v246
  %v2712 = vmul.f32 %v2706, %v246
  %v2713 = vmul.f32 %v2709, %v246
  %v2714 = vadd.f32 %v2710, 1e-05
  %v2715 = vadd.f32 %v2711, 1e-05
  %v2716 = vadd.f32 %v2712, 1e-05
  %v2717 = vadd.f32 %v2713, 1e-05
  %v2718 = vrsqrt.pop %v2714
  %v2719 = vrsqrt.pop %v2715
  %v2720 = vrsqrt.pop %v2716
  %v2721 = vrsqrt.pop %v2717
  %v2722 = vmul.f32 %v2690, %v2718
  %v2723 = vmul.f32 %v2691, %v2719
  %v2724 = vmul.f32 %v2692, %v2720
  %v2725 = vmul.f32 %v2693, %v2721
  %v2726 = vmul.f32 %v2722, %v41
  %v2727 = vmul.f32 %v2723, %v41
  %v2728 = vmul.f32 %v2724, %v41
  %v2729 = vmul.f32 %v2725, %v41
  %v2730 = vadd.f32 %v2726, %v1493
  %v2731 = vadd.f32 %v2727, %v1493
  %v2732 = vadd.f32 %v2728, %v1493
  %v2733 = vadd.f32 %v2729, %v1493
  %v2735 = vsel %vm124, %v2730, 0
  %v2738 = vsel %vm124, %v2731, 0
  %v2741 = vsel %vm124, %v2732, 0
  %v2744 = vsel %vm124, %v2733, 0
  %2746 = vmatprep.subr.mxu0 0.0
  %2747 = vmatpush1.msra.mxu0 %v26
  %2748 = vmatprep.subr.mxu0 0.0
  %2749 = vmatpush1.msra.mxu0 %v27
  %2750 = vmatprep.subr.mxu0 0.0
  %2751 = vmatpush1.msra.mxu0 %v28
  %2752 = vmatprep.subr.mxu0 0.0
  %2753 = vmatpush1.msra.mxu0 %v29
  %2754 = vmatprep.subr.mxu0 0.0
  %2755 = vmatpush1.msra.mxu0 0.0
  %2756 = vmatprep.subr.mxu0 0.0
  %2757 = vmatpush1.msra.mxu0 0.0
  %2758 = vmatprep.subr.mxu0 0.0
  %2759 = vmatpush1.msra.mxu0 0.0
  %2760 = vmatprep.subr.mxu0 0.0
  %2761 = vmatpush1.msra.mxu0 0.0
  %2762 = vmatprep.subr.mxu0 0.0
  %2763 = vmatpush1.msra.mxu0 0.0
  %2764 = vmatprep.subr.mxu0 0.0
  %2765 = vmatpush1.msra.mxu0 0.0
  %2766 = vmatprep.subr.mxu0 0.0
  %2767 = vmatpush1.msra.mxu0 0.0
  %2768 = vmatprep.subr.mxu0 0.0
  %2769 = vmatpush1.msra.mxu0 0.0
  %2770 = vmatprep.subr.mxu0 0.0
  %2771 = vmatpush1.msra.mxu0 0.0
  %2772 = vmatprep.subr.mxu0 0.0
  %2773 = vmatpush1.msra.mxu0 0.0
  %2774 = vmatprep.subr.mxu0 0.0
  %2775 = vmatpush1.msra.mxu0 0.0
  %2776 = vmatprep.subr.mxu0 0.0
  %2777 = vmatpush1.msra.mxu0 0.0
  %2778 = vmatprep.subr.mxu0 0.0
  %2779 = vmatpush1.msra.mxu0 0.0
  %2780 = vmatprep.subr.mxu0 0.0
  %2781 = vmatpush1.msra.mxu0 0.0
  %2782 = vmatprep.subr.mxu0 0.0
  %2783 = vmatpush1.msra.mxu0 0.0
  %2784 = vmatprep.subr.mxu0 0.0
  %2785 = vmatpush1.msra.mxu0 0.0
  %2786 = vmatprep.subr.mxu0 0.0
  %2787 = vmatpush1.msra.mxu0 0.0
  %2788 = vmatprep.subr.mxu0 0.0
  %2789 = vmatpush1.msra.mxu0 0.0
  %2790 = vmatprep.subr.mxu0 0.0
  %2791 = vmatpush1.msra.mxu0 0.0
  %2792 = vmatprep.subr.mxu0 0.0
  %2793 = vmatpush1.msra.mxu0 0.0
  %2794 = vmatprep.subr.mxu0 0.0
  %2795 = vmatpush1.msra.mxu0 0.0
  %2796 = vmatprep.subr.mxu0 0.0
  %2797 = vmatpush1.msra.mxu0 0.0
  %2798 = vmatprep.subr.mxu0 0.0
  %2799 = vmatpush1.msra.mxu0 0.0
  %2800 = vmatprep.subr.mxu0 0.0
  %2801 = vmatpush1.msra.mxu0 0.0
  %2802 = vmatprep.subr.mxu0 0.0
  %2803 = vmatpush1.msra.mxu0 0.0
  %2804 = vmatprep.subr.mxu0 0.0
  %2805 = vmatpush1.msra.mxu0 0.0
  %2806 = vmatprep.subr.mxu0 0.0
  %2807 = vmatpush1.msra.mxu0 0.0
  %2808 = vmatprep.subr.mxu0 0.0
  %2809 = vmatpush1.msra.mxu0 0.0
  %2810 = vmatprep.mubr.f32.mxu0 0.0
  %2811 = vmatmul.mubr.f32.gmra.mrb[0].mxu0 %v2735
  %v2812 = vpop.f32.mrb[0].mxu0
  %v2813 = vadd.f32 %v39, %v2812
  %v2814 = vpop.f32.mrb[0].mxu0
  %2815 = vmatprep.mubr.f32.mxu0 0.0
  %2816 = vmatmul.mubr.f32.gmra.mrb[0].mxu0 %v2738
  %v2817 = vpop.f32.mrb[0].mxu0
  %v2818 = vadd.f32 %v39, %v2817
  %v2819 = vpop.f32.mrb[0].mxu0
  %2820 = vmatprep.mubr.f32.mxu0 0.0
  %2821 = vmatmul.mubr.f32.gmra.mrb[0].mxu0 %v2741
  %v2822 = vpop.f32.mrb[0].mxu0
  %v2823 = vadd.f32 %v39, %v2822
  %v2824 = vpop.f32.mrb[0].mxu0
  %2825 = vmatprep.mubr.f32.mxu0 0.0
  %2826 = vmatmul.mubr.f32.gmra.mrb[0].mxu0 %v2744
  %v2827 = vpop.f32.mrb[0].mxu0
  %v2828 = vadd.f32 %v39, %v2827
  %v2829 = vpop.f32.mrb[0].mxu0
  %2830 = vdwg.mxu0
  %v2831 = vmax.f32 %v2813, 0.0
  %v2832 = vmax.f32 %v2818, 0.0
  %v2833 = vmax.f32 %v2823, 0.0
  %v2834 = vmax.f32 %v2828, 0.0
  %v2836 = vsel %vm1612, %v2831, 0
  %v2839 = vsel %vm1612, %v2832, 0
  %v2842 = vsel %vm1612, %v2833, 0
  %v2845 = vsel %vm1612, %v2834, 0
  %2847 = vmatprep.subr.mxu0 0.0
  %2848 = vmatpush1.xpose.msra.mxu0 %v1625
  %2849 = vmatprep.subr.mxu0 0.0
  %2850 = vmatpush1.xpose.msra.mxu0 %v1627
  %2851 = vmatprep.subr.mxu0 0.0
  %2852 = vmatpush1.xpose.msra.mxu0 %v1629
  %2853 = vmatprep.subr.mxu0 0.0
  %2854 = vmatpush1.xpose.msra.mxu0 %v1631
  %2855 = vmatprep.subr.mxu0 0.0
  %2856 = vmatpush1.xpose.msra.mxu0 0.0
  %2857 = vmatprep.subr.mxu0 0.0
  %2858 = vmatpush1.xpose.msra.mxu0 0.0
  %2859 = vmatprep.subr.mxu0 0.0
  %2860 = vmatpush1.xpose.msra.mxu0 0.0
  %2861 = vmatprep.subr.mxu0 0.0
  %2862 = vmatpush1.xpose.msra.mxu0 0.0
  %2863 = vmatprep.subr.mxu0 0.0
  %2864 = vmatpush1.xpose.msra.mxu0 0.0
  %2865 = vmatprep.subr.mxu0 0.0
  %2866 = vmatpush1.xpose.msra.mxu0 0.0
  %2867 = vmatprep.subr.mxu0 0.0
  %2868 = vmatpush1.xpose.msra.mxu0 0.0
  %2869 = vmatprep.subr.mxu0 0.0
  %2870 = vmatpush1.xpose.msra.mxu0 0.0
  %2871 = vmatprep.subr.mxu0 0.0
  %2872 = vmatpush1.xpose.msra.mxu0 0.0
  %2873 = vmatprep.subr.mxu0 0.0
  %2874 = vmatpush1.xpose.msra.mxu0 0.0
  %2875 = vmatprep.subr.mxu0 0.0
  %2876 = vmatpush1.xpose.msra.mxu0 0.0
  %2877 = vmatprep.subr.mxu0 0.0
  %2878 = vmatpush1.xpose.msra.mxu0 0.0
  %2879 = vmatprep.subr.mxu0 0.0
  %2880 = vmatpush1.xpose.msra.mxu0 0.0
  %2881 = vmatprep.subr.mxu0 0.0
  %2882 = vmatpush1.xpose.msra.mxu0 0.0
  %2883 = vmatprep.subr.mxu0 0.0
  %2884 = vmatpush1.xpose.msra.mxu0 0.0
  %2885 = vmatprep.subr.mxu0 0.0
  %2886 = vmatpush1.xpose.msra.mxu0 0.0
  %2887 = vmatprep.subr.mxu0 0.0
  %2888 = vmatpush1.xpose.msra.mxu0 0.0
  %2889 = vmatprep.subr.mxu0 0.0
  %2890 = vmatpush1.xpose.msra.mxu0 0.0
  %2891 = vmatprep.subr.mxu0 0.0
  %2892 = vmatpush1.xpose.msra.mxu0 0.0
  %2893 = vmatprep.subr.mxu0 0.0
  %2894 = vmatpush1.xpose.msra.mxu0 0.0
  %2895 = vmatprep.subr.mxu0 0.0
  %2896 = vmatpush1.xpose.msra.mxu0 0.0
  %2897 = vmatprep.subr.mxu0 0.0
  %2898 = vmatpush1.xpose.msra.mxu0 0.0
  %2899 = vmatprep.subr.mxu0 0.0
  %2900 = vmatpush1.xpose.msra.mxu0 0.0
  %2901 = vmatprep.subr.mxu0 0.0
  %2902 = vmatpush1.xpose.msra.mxu0 0.0
  %2903 = vmatprep.subr.mxu0 0.0
  %2904 = vmatpush1.xpose.msra.mxu0 0.0
  %2905 = vmatprep.subr.mxu0 0.0
  %2906 = vmatpush1.xpose.msra.mxu0 0.0
  %2907 = vmatprep.subr.mxu0 0.0
  %2908 = vmatpush1.xpose.msra.mxu0 0.0
  %2909 = vmatprep.subr.mxu0 0.0
  %2910 = vmatpush1.xpose.msra.mxu0 0.0
  %2911 = vmatprep.mubr.f32.mxu0 0.0
  %2912 = vmatmul.mubr.f32.gmra.mrb[0].mxu0 %v2836
  %v2913 = vpop.f32.mrb[0].mxu0
  %v2914 = vadd.f32 0.0, %v2913
  %v2915 = vpop.f32.mrb[0].mxu0
  %2916 = vmatprep.mubr.f32.mxu0 0.0
  %2917 = vmatmul.mubr.f32.gmra.mrb[0].mxu0 %v2839
  %v2918 = vpop.f32.mrb[0].mxu0
  %v2919 = vadd.f32 0.0, %v2918
  %v2920 = vpop.f32.mrb[0].mxu0
  %2921 = vmatprep.mubr.f32.mxu0 0.0
  %2922 = vmatmul.mubr.f32.gmra.mrb[0].mxu0 %v2842
  %v2923 = vpop.f32.mrb[0].mxu0
  %v2924 = vadd.f32 0.0, %v2923
  %v2925 = vpop.f32.mrb[0].mxu0
  %2926 = vmatprep.mubr.f32.mxu0 0.0
  %2927 = vmatmul.mubr.f32.gmra.mrb[0].mxu0 %v2845
  %v2928 = vpop.f32.mrb[0].mxu0
  %v2929 = vadd.f32 0.0, %v2928
  %v2930 = vpop.f32.mrb[0].mxu0
  %2931 = vdwg.mxu0
  %v2932 = vadd.f32 %v2670, %v2914
  %v2933 = vadd.f32 %v2671, %v2919
  %v2934 = vadd.f32 %v2672, %v2924
  %v2935 = vadd.f32 %v2673, %v2929
  %v2936 = vadd.f32 %v2932, %v1723
  %v2937 = vadd.f32 %v2933, %v1723
  %v2938 = vadd.f32 %v2934, %v1723
  %v2939 = vadd.f32 %v2935, %v1723
  %v2941 = vsel %vm124, %v2936, 0
  %v2944 = vsel %vm124, %v2937, 0
  %v2947 = vsel %vm124, %v2938, 0
  %v2950 = vsel %vm124, %v2939, 0
  %2952 = vmatprep.subr.mxu0 0.0
  %2953 = vmatpush1.xpose.msra.mxu0 %v2941
  %2954 = vmatprep.subr.mxu0 0.0
  %2955 = vmatpush1.xpose.msra.mxu0 %v2944
  %2956 = vmatprep.subr.mxu0 0.0
  %2957 = vmatpush1.xpose.msra.mxu0 %v2947
  %2958 = vmatprep.subr.mxu0 0.0
  %2959 = vmatpush1.xpose.msra.mxu0 %v2950
  %2960 = vmatprep.subr.mxu0 0.0
  %2961 = vmatpush1.xpose.msra.mxu0 0.0
  %2962 = vmatprep.subr.mxu0 0.0
  %2963 = vmatpush1.xpose.msra.mxu0 0.0
  %2964 = vmatprep.subr.mxu0 0.0
  %2965 = vmatpush1.xpose.msra.mxu0 0.0
  %2966 = vmatprep.subr.mxu0 0.0
  %2967 = vmatpush1.xpose.msra.mxu0 0.0
  %2968 = vmatprep.subr.mxu0 0.0
  %2969 = vmatpush1.xpose.msra.mxu0 0.0
  %2970 = vmatprep.subr.mxu0 0.0
  %2971 = vmatpush1.xpose.msra.mxu0 0.0
  %2972 = vmatprep.subr.mxu0 0.0
  %2973 = vmatpush1.xpose.msra.mxu0 0.0
  %2974 = vmatprep.subr.mxu0 0.0
  %2975 = vmatpush1.xpose.msra.mxu0 0.0
  %2976 = vmatprep.subr.mxu0 0.0
  %2977 = vmatpush1.xpose.msra.mxu0 0.0
  %2978 = vmatprep.subr.mxu0 0.0
  %2979 = vmatpush1.xpose.msra.mxu0 0.0
  %2980 = vmatprep.subr.mxu0 0.0
  %2981 = vmatpush1.xpose.msra.mxu0 0.0
  %2982 = vmatprep.subr.mxu0 0.0
  %2983 = vmatpush1.xpose.msra.mxu0 0.0
  %2984 = vmatprep.subr.mxu0 0.0
  %2985 = vmatpush1.xpose.msra.mxu0 0.0
  %2986 = vmatprep.subr.mxu0 0.0
  %2987 = vmatpush1.xpose.msra.mxu0 0.0
  %2988 = vmatprep.subr.mxu0 0.0
  %2989 = vmatpush1.xpose.msra.mxu0 0.0
  %2990 = vmatprep.subr.mxu0 0.0
  %2991 = vmatpush1.xpose.msra.mxu0 0.0
  %2992 = vmatprep.subr.mxu0 0.0
  %2993 = vmatpush1.xpose.msra.mxu0 0.0
  %2994 = vmatprep.subr.mxu0 0.0
  %2995 = vmatpush1.xpose.msra.mxu0 0.0
  %2996 = vmatprep.subr.mxu0 0.0
  %2997 = vmatpush1.xpose.msra.mxu0 0.0
  %2998 = vmatprep.subr.mxu0 0.0
  %2999 = vmatpush1.xpose.msra.mxu0 0.0
  %3000 = vmatprep.subr.mxu0 0.0
  %3001 = vmatpush1.xpose.msra.mxu0 0.0
  %3002 = vmatprep.subr.mxu0 0.0
  %3003 = vmatpush1.xpose.msra.mxu0 0.0
  %3004 = vmatprep.subr.mxu0 0.0
  %3005 = vmatpush1.xpose.msra.mxu0 0.0
  %3006 = vmatprep.subr.mxu0 0.0
  %3007 = vmatpush1.xpose.msra.mxu0 0.0
  %3008 = vmatprep.subr.mxu0 0.0
  %3009 = vmatpush1.xpose.msra.mxu0 0.0
  %3010 = vmatprep.subr.mxu0 0.0
  %3011 = vmatpush1.xpose.msra.mxu0 0.0
  %3012 = vmatprep.subr.mxu0 0.0
  %3013 = vmatpush1.xpose.msra.mxu0 0.0
  %3014 = vmatprep.subr.mxu0 0.0
  %3015 = vmatpush1.xpose.msra.mxu0 0.0
  %3016 = vmatprep.mubr.f32.mxu0 0.0
  %3017 = vmatmul.mubr.f32.gmra.mrb[0].mxu0 %v126
  %v3018 = vpop.f32.mrb[0].mxu0
  %v3019 = vadd.f32 0.0, %v3018
  %v3020 = vpop.f32.mrb[0].mxu0
  %3021 = vmatprep.mubr.f32.mxu0 0.0
  %3022 = vmatmul.mubr.f32.gmra.mrb[0].mxu0 %v129
  %v3023 = vpop.f32.mrb[0].mxu0
  %v3024 = vadd.f32 0.0, %v3023
  %v3025 = vpop.f32.mrb[0].mxu0
  %3026 = vmatprep.mubr.f32.mxu0 0.0
  %3027 = vmatmul.mubr.f32.gmra.mrb[0].mxu0 %v132
  %v3028 = vpop.f32.mrb[0].mxu0
  %v3029 = vadd.f32 0.0, %v3028
  %v3030 = vpop.f32.mrb[0].mxu0
  %3031 = vmatprep.mubr.f32.mxu0 0.0
  %3032 = vmatmul.mubr.f32.gmra.mrb[0].mxu0 %v135
  %v3033 = vpop.f32.mrb[0].mxu0
  %v3034 = vadd.f32 0.0, %v3033
  %v3035 = vpop.f32.mrb[0].mxu0
  %3036 = vdwg.mxu0
  %3037 = vst.msk [vmem:[%s3] sm:$0xff] %vm99, %v3019
  %3038 = vst.msk [vmem:[%s3 + $0x8] sm:$0xff] %vm99, %v3024
  %3039 = vst.msk [vmem:[%s3 + $0x10] sm:$0xff] %vm99, %v3029
  %3040 = vst.msk [vmem:[%s3 + $0x18] sm:$0xff] %vm99, %v3034
  %3045 = vrot.lane.b32.xlu0 %v3019, 112
  %v3046 = vpop.permute.xlu0 %3045
  %3047 = vrot.lane.b32.xlu0 %v3024, 112
  %v3048 = vpop.permute.xlu0 %3047
  %3049 = vrot.lane.b32.xlu0 %v3029, 112
  %v3050 = vpop.permute.xlu0 %3049
  %3051 = vrot.lane.b32.xlu0 %v3034, 112
  %v3052 = vpop.permute.xlu0 %3051
  %s3057 = scalar_lea.vmem %s3, 32
  %3058 = vst.msk [vmem:[%s3057] sm:$0xff] %vm99, %v3046
  %3059 = vst.msk [vmem:[%s3057 + $0x8] sm:$0xff] %vm99, %v3048
  %3060 = vst.msk [vmem:[%s3057 + $0x10] sm:$0xff] %vm99, %v3050
  %3061 = vst.msk [vmem:[%s3057 + $0x18] sm:$0xff] %vm99, %v3052
  // Predicated region
  $region14: #{trans_en_forward.1} parent=0 // pred_check
    _
  $region15: #{trans_en_forward.1} parent=0 // pred_check_branch
    %3063 = sbr.rel (0) target = $region17
  $region16: #{trans_en_forward.1} parent=0 // pred_region
    _
  $region17: #{trans_en_forward.1} parent=0 // pred_fallthru
    _
  // Predicated region
  $region18: #{trans_en_forward.1} parent=0 // pred_check
    _
  $region19: #{trans_en_forward.1} parent=0 // pred_check_branch
    %3065 = sbr.rel (0) target = $region21
  $region20: #{trans_en_forward.1} parent=0 // pred_region
    _
  $region21: #{trans_en_forward.1} parent=0 // pred_fallthru
    _

</llo_original>
